<compile_context>
chip_gen: v7x
topology: tpu7x:2x2x1
jax: 0.10.0
libtpu: 0.0.40
codegen_flags: <defaults>
</compile_context>

<pallas_src>
import numpy as np
import jax
import jax.numpy as jnp
from jax.experimental import pallas as pl
from jax.experimental.pallas import tpu as pltpu


def _leaky(v):
    return jnp.where(v >= 0, v, 0.1 * v)


def fold_bn(gamma, beta, mean, var, eps=1e-5):
    """Fold eval-mode BatchNorm into a per-channel (scale, bias)."""
    gamma = gamma.astype(jnp.float32)
    beta = beta.astype(jnp.float32)
    mean = mean.astype(jnp.float32)
    var = var.astype(jnp.float32)
    s = gamma / jnp.sqrt(var + eps)
    b = beta - mean * s
    return s.reshape(1, -1), b.reshape(1, -1)


def bottleneck_kernel(x_ref, x_hbm, w1_ref, b1_ref, w2_ref, b2_ref,
                      w3_ref, b3_ref, o_ref, halo_ref, h1pad_ref, sem):
    # x_ref   : (1, TH, W, C)  f32   -- pipelined row block
    # x_hbm   : (N, H, W, C)   f32   -- full input in HBM (halo rows only)
    # w1_ref  : (C, P)   bf16 (BN1 scale folded)     b1_ref: (1, P) f32
    # w2_ref  : (3,3,P,P) bf16 (BN2 scale folded)    b2_ref: (1, P) f32
    # w3_ref  : (P, C)   bf16 (BN3 scale folded)     b3_ref: (1, C) f32
    # halo_ref: (2, W, C) f32 scratch, h1pad_ref: (TH+2, W, P) f32 scratch
    n = pl.program_id(0)
    r = pl.program_id(1)
    R = pl.num_programs(1)

    _, TH, W, Cin = x_ref.shape
    P = w1_ref.shape[1]
    M = TH * W

    row_top = r * TH - 1
    row_bot = (r + 1) * TH
    have_top = r > 0
    have_bot = r < R - 1

    # ---- kick off halo-row DMAs (overlap them with conv1 on the main rows) ----
    @pl.when(have_top)
    def _():
        pltpu.make_async_copy(x_hbm.at[n, pl.ds(row_top, 1)],
                              halo_ref.at[pl.ds(0, 1)], sem.at[0]).start()

    @pl.when(have_bot)
    def _():
        pltpu.make_async_copy(x_hbm.at[n, pl.ds(row_bot, 1)],
                              halo_ref.at[pl.ds(1, 1)], sem.at[1]).start()

    # ---- conv1x1 (+folded bn1 bias) + LeakyReLU on the TH main rows -----------
    x2d = x_ref[...].reshape(M, Cin)                       # f32, reused as identity
    h1 = jnp.dot(x2d.astype(jnp.bfloat16), w1_ref[...],
                 preferred_element_type=jnp.float32)
    h1 = _leaky(h1 + b1_ref[...])                          # (M, P) f32
    h1pad_ref[pl.ds(1, TH)] = h1.reshape(TH, W, P)

    # ---- halo rows of h1 (or zero padding at the image border) ----------------
    @pl.when(have_top)
    def _():
        pltpu.make_async_copy(x_hbm.at[n, pl.ds(row_top, 1)],
                              halo_ref.at[pl.ds(0, 1)], sem.at[0]).wait()
        ht = jnp.dot(halo_ref[0].astype(jnp.bfloat16), w1_ref[...],
                     preferred_element_type=jnp.float32)
        h1pad_ref[pl.ds(0, 1)] = _leaky(ht + b1_ref[...]).reshape(1, W, P)

    @pl.when(r == 0)
    def _():
        h1pad_ref[pl.ds(0, 1)] = jnp.zeros((1, W, P), jnp.float32)

    @pl.when(have_bot)
    def _():
        pltpu.make_async_copy(x_hbm.at[n, pl.ds(row_bot, 1)],
                              halo_ref.at[pl.ds(1, 1)], sem.at[1]).wait()
        hb = jnp.dot(halo_ref[1].astype(jnp.bfloat16), w1_ref[...],
                     preferred_element_type=jnp.float32)
        h1pad_ref[pl.ds(TH + 1, 1)] = _leaky(hb + b1_ref[...]).reshape(1, W, P)

    @pl.when(r == R - 1)
    def _():
        h1pad_ref[pl.ds(TH + 1, 1)] = jnp.zeros((1, W, P), jnp.float32)

    # ---- conv3x3 (+folded bn2 bias) + LeakyReLU --------------------------------
    # Flatten the row-padded h1 to ((TH+2)*W, P): column shifts become sublane
    # rolls (XLU) + a wrap mask (VPU); row shifts become W-aligned sublane slices.
    Mp = (TH + 2) * W
    hp = h1pad_ref[...].reshape(Mp, P)                     # f32
    col = jax.lax.broadcasted_iota(jnp.int32, (Mp, 1), 0) % W
    left = jnp.where(col != 0, pltpu.roll(hp, 1, axis=0), 0.0)       # value at j-1
    right = jnp.where(col != W - 1, pltpu.roll(hp, Mp - 1, axis=0), 0.0)  # j+1

    taps = (left.astype(jnp.bfloat16),    # kw = 0  -> column j-1
            hp.astype(jnp.bfloat16),      # kw = 1  -> column j
            right.astype(jnp.bfloat16))   # kw = 2  -> column j+1

    acc = None
    for di in range(3):                                    # kh: padded row offset
        for dj in range(3):                                # kw
            patch = jax.lax.slice_in_dim(taps[dj], di * W, di * W + M, axis=0)
            t = jnp.dot(patch, w2_ref[di, dj],
                        preferred_element_type=jnp.float32)
            acc = t if acc is None else acc + t
    h2 = _leaky(acc + b2_ref[...])                         # (M, P) f32

    # ---- conv1x1 expand (+folded bn3 bias) + residual + LeakyReLU -------------
    h3 = jnp.dot(h2.astype(jnp.bfloat16), w3_ref[...],
                 preferred_element_type=jnp.float32)
    out = _leaky(h3 + b3_ref[...] + x2d)                   # identity add in f32
    o_ref[...] = out.reshape(1, TH, W, Cin)


def bottleneck_forward_nhwc(x_nhwc, params, *, row_tile=None):
    """NHWC-native fused Bottleneck forward.  x_nhwc: (N, H, W, C), C == planes*4."""
    N, H, W, C = x_nhwc.shape
    w1, bn1, w2, bn2, w3, bn3 = params
    Cin, P = w1.shape
    assert Cin == C and w3.shape == (P, C) and C == 4 * P, \
        "stride=1 / downsample=None Bottleneck requires inplanes == planes*4"

    # Fold BN scales into the (bf16) conv weights; keep biases in f32.
    s1, b1 = fold_bn(*bn1)
    s2, b2 = fold_bn(*bn2)
    s3, b3 = fold_bn(*bn3)
    w1s = (w1.astype(jnp.float32) * s1).astype(jnp.bfloat16)
    w2s = (w2.astype(jnp.float32) * s2.reshape(1, 1, 1, P)).astype(jnp.bfloat16)
    w3s = (w3.astype(jnp.float32) * s3).astype(jnp.bfloat16)

    # Pick a row tile (~2 MiB of f32 input per block) that divides H.
    if row_tile is None:
        target = max(8, (2 * 1024 * 1024) // (W * C * 4))
        row_tile = H
        for th in range(min(target, H), 0, -1):
            if H % th == 0:
                row_tile = th
                break
    assert H % row_tile == 0, "row_tile must divide H"
    TH = row_tile
    R = H // TH

    x = x_nhwc.astype(jnp.float32)

    # Explicit scoped-VMEM budget: double-buffered in/out blocks + weights +
    # scratch + elementwise temporaries (clamped to [16 MiB, 48 MiB]).
    blk = TH * W * C * 4
    wbytes = 2 * (w1s.size + w2s.size + w3s.size) + 4 * (b1.size + b2.size + b3.size)
    scratch = 2 * W * C * 4 + (TH + 2) * W * P * 4
    est = 4 * blk + 2 * wbytes + scratch + 8 * blk
    vmem_limit = int(min(max(est, 16 * 1024 * 1024), 48 * 1024 * 1024))

    grid_spec = pltpu.PrefetchScalarGridSpec(
        num_scalar_prefetch=0,
        grid=(N, R),
        in_specs=[
            pl.BlockSpec((1, TH, W, C), lambda n, r: (n, r, 0, 0)),   # x row block
            pl.BlockSpec(memory_space=pl.ANY),                        # x (HBM, halos)
            pl.BlockSpec((C, P), lambda n, r: (0, 0)),                # w1 * s1 (bf16)
            pl.BlockSpec((1, P), lambda n, r: (0, 0)),                # b1
            pl.BlockSpec((3, 3, P, P), lambda n, r: (0, 0, 0, 0)),    # w2 * s2 (bf16)
            pl.BlockSpec((1, P), lambda n, r: (0, 0)),                # b2
            pl.BlockSpec((P, C), lambda n, r: (0, 0)),                # w3 * s3 (bf16)
            pl.BlockSpec((1, C), lambda n, r: (0, 0)),                # b3
        ],
        out_specs=pl.BlockSpec((1, TH, W, C), lambda n, r: (n, r, 0, 0)),
        scratch_shapes=[
            pltpu.VMEM((2, W, C), jnp.float32),         # halo x rows
            pltpu.VMEM((TH + 2, W, P), jnp.float32),    # row-padded h1
            pltpu.SemaphoreType.DMA((2,)),
        ],
    )

    return pl.pallas_call(
        bottleneck_kernel,
        out_shape=jax.ShapeDtypeStruct((N, H, W, C), jnp.float32),
        grid_spec=grid_spec,
        compiler_params=pltpu.CompilerParams(
            dimension_semantics=("parallel", "parallel"),
            vmem_limit_bytes=vmem_limit),
    )(x, x, w1s, b1, w2s, b2, w3s, b3)


def bottleneck_forward(x_nchw, params, *, row_tile=None):
    """NCHW compatibility shim (PyTorch layout).  Prefer the NHWC entry point so the
    layout change can be folded into adjacent layers instead of extra HBM traffic."""
    x_nhwc = jnp.transpose(x_nchw, (0, 2, 3, 1))
    out = bottleneck_forward_nhwc(x_nhwc, params, row_tile=row_tile)
    return jnp.transpose(out, (0, 3, 1, 2))


# ----------------------- pure-JAX references (sanity checks) --------------------------
def bottleneck_ref_bf16_nhwc(x_nhwc, params):
    """Numerics-matched reference: BN folded into bf16 weights, f32 accumulation."""
    w1, bn1, w2, bn2, w3, bn3 = params
    Cin, P = w1.shape
    C = w3.shape[1]
    s1, b1 = fold_bn(*bn1)
    s2, b2 = fold_bn(*bn2)
    s3, b3 = fold_bn(*bn3)
    w1s = (w1 * s1).astype(jnp.bfloat16)
    w2s = (w2 * s2.reshape(1, 1, 1, P)).astype(jnp.bfloat16)
    w3s = (w3 * s3).astype(jnp.bfloat16)
    dn = ('NHWC', 'HWIO', 'NHWC')

    def conv(h, w, pad):
        return jax.lax.conv_general_dilated(h.astype(jnp.bfloat16), w, (1, 1), pad,
                                            dimension_numbers=dn,
                                            preferred_element_type=jnp.float32)

    def lrelu(h):
        return jnp.where(h >= 0, h, 0.1 * h)

    x = x_nhwc.astype(jnp.float32)
    h = lrelu(conv(x, w1s.reshape(1, 1, Cin, P), 'VALID') + b1.reshape(1, 1, 1, P))
    h = lrelu(conv(h, w2s, [(1, 1), (1, 1)]) + b2.reshape(1, 1, 1, P))
    h = conv(h, w3s.reshape(1, 1, P, C), 'VALID') + b3.reshape(1, 1, 1, C)
    return lrelu(h + x)


def bottleneck_ref_f32_nchw(x_nchw, params, eps=1e-5):
    """Module-faithful reference (conv -> BN(eval) -> LeakyReLU(0.1), residual)."""
    w1, bn1, w2, bn2, w3, bn3 = params
    Cin, P = w1.shape
    C = w3.shape[1]
    x = jnp.transpose(x_nchw, (0, 2, 3, 1)).astype(jnp.float32)
    dn = ('NHWC', 'HWIO', 'NHWC')

    def bn(h, g, b, m, v):
        return (h - m) / jnp.sqrt(v + eps) * g + b

    def lrelu(h):
        return jnp.where(h >= 0, h, 0.1 * h)

    h = jax.lax.conv_general_dilated(x, w1.reshape(1, 1, Cin, P), (1, 1), 'VALID',
                                     dimension_numbers=dn)
    h = lrelu(bn(h, *bn1))
    h = jax.lax.conv_general_dilated(h, w2, (1, 1), [(1, 1), (1, 1)],
                                     dimension_numbers=dn)
    h = lrelu(bn(h, *bn2))
    h = jax.lax.conv_general_dilated(h, w3.reshape(1, 1, P, C), (1, 1), 'VALID',
                                     dimension_numbers=dn)
    h = bn(h, *bn3)
    h = lrelu(h + x)
    return jnp.transpose(h, (0, 3, 1, 2))


if __name__ == "__main__":
    # Small but lane-dense shapes: batch=2, planes=32 => inplanes = 128, spatial 16x16.
    # row_tile=4 forces a (2, 4) grid so interior tiles exercise both halo DMAs.
    N, planes, H, W = 2, 32, 16, 16
    inplanes = planes * 4

    key = jax.random.PRNGKey(0)
    ks = jax.random.split(key, 8)

    x_nchw = jax.random.normal(ks[0], (N, inplanes, H, W), jnp.float32)

    # Weights in "matmul" layout: w1 (Cin, P), w2 HWIO (3,3,P,P), w3 (P, 4P).
    w1 = 0.1 * jax.random.normal(ks[1], (inplanes, planes), jnp.float32)
    w2 = 0.1 * jax.random.normal(ks[2], (3, 3, planes, planes), jnp.float32)
    w3 = 0.1 * jax.random.normal(ks[3], (planes, inplanes), jnp.float32)

    def bn_params(k, c):
        k1, k2, k3, k4 = jax.random.split(k, 4)
        gamma = 1.0 + 0.1 * jax.random.normal(k1, (c,), jnp.float32)
        beta = 0.1 * jax.random.normal(k2, (c,), jnp.float32)
        mean = 0.1 * jax.random.normal(k3, (c,), jnp.float32)
        var = 1.0 + 0.1 * jax.random.uniform(k4, (c,), jnp.float32)
        return (gamma, beta, mean, var)

    bn1 = bn_params(ks[4], planes)
    bn2 = bn_params(ks[5], planes)
    bn3 = bn_params(ks[6], inplanes)
    params = (w1, bn1, w2, bn2, w3, bn3)

    # --- NHWC-native path vs numerics-matched reference (tight) ---
    x_nhwc = jnp.transpose(x_nchw, (0, 2, 3, 1))
    out_nhwc = jax.block_until_ready(
        bottleneck_forward_nhwc(x_nhwc, params, row_tile=4))
    ref_bf16 = jax.block_until_ready(bottleneck_ref_bf16_nhwc(x_nhwc, params))
    np.testing.assert_allclose(np.asarray(out_nhwc), np.asarray(ref_bf16),
                               rtol=1e-2, atol=1e-2)

    # --- NCHW compatibility shim vs module-faithful f32 reference (loose: bf16 MXU) ---
    out_nchw = jax.block_until_ready(bottleneck_forward(x_nchw, params, row_tile=4))
    ref_f32 = jax.block_until_ready(bottleneck_ref_f32_nchw(x_nchw, params))
    np.testing.assert_allclose(np.asarray(out_nchw), np.asarray(ref_f32),
                               rtol=1e-1, atol=1e-1)

    print("KERNEL_OK")
</pallas_src>

<mosaic_0001>
module attributes {stable_mosaic.version = 11 : i64} {
  func.func @bottleneck_kernel(%arg0: i32, %arg1: i32, %arg2: memref<1x4x16x128xf32, #tpu.memory_space<vmem>>, %arg3: memref<2x16x16x128xf32, #tpu.memory_space<any>>, %arg4: memref<128x32xbf16, #tpu.memory_space<vmem>>, %arg5: memref<1x32xf32, #tpu.memory_space<vmem>>, %arg6: memref<3x3x32x32xbf16, #tpu.memory_space<vmem>>, %arg7: memref<1x32xf32, #tpu.memory_space<vmem>>, %arg8: memref<32x128xbf16, #tpu.memory_space<vmem>>, %arg9: memref<1x128xf32, #tpu.memory_space<vmem>>, %arg10: memref<1x4x16x128xf32, #tpu.memory_space<vmem>>, %arg11: memref<2x16x128xf32, #tpu.memory_space<vmem>>, %arg12: memref<6x16x32xf32, #tpu.memory_space<vmem>>, %arg13: memref<2x!tpu.dma_semaphore, #tpu.memory_space<semaphore_mem>>) attributes {dimension_semantics = [#tpu.dimension_semantics<parallel>, #tpu.dimension_semantics<parallel>], iteration_bounds = array<i64: 2, 4>, scalar_prefetch = 0 : i64, scratch_operands = 3 : i64, tpu.core_type = #tpu.core_type<tc>, window_params = [{transform_indices = @transform_0, window_bounds = array<i64: 1, 4, 16, 128>}, {}, {pipeline_mode = #tpu.pipeline_mode<synchronous>, transform_indices = @transform_2, window_bounds = array<i64: 128, 32>}, {pipeline_mode = #tpu.pipeline_mode<synchronous>, transform_indices = @transform_3, window_bounds = array<i64: 1, 32>}, {pipeline_mode = #tpu.pipeline_mode<synchronous>, transform_indices = @transform_4, window_bounds = array<i64: 3, 3, 32, 32>}, {pipeline_mode = #tpu.pipeline_mode<synchronous>, transform_indices = @transform_5, window_bounds = array<i64: 1, 32>}, {pipeline_mode = #tpu.pipeline_mode<synchronous>, transform_indices = @transform_6, window_bounds = array<i64: 32, 128>}, {pipeline_mode = #tpu.pipeline_mode<synchronous>, transform_indices = @transform_7, window_bounds = array<i64: 1, 128>}, {transform_indices = @transform_8, window_bounds = array<i64: 1, 4, 16, 128>}]} {
    %c4_i32 = arith.constant 4 : i32
    %0 = arith.muli %arg1, %c4_i32 : i32
    %c1_i32 = arith.constant 1 : i32
    %1 = arith.subi %0, %c1_i32 : i32
    %c1_i32_0 = arith.constant 1 : i32
    %2 = arith.addi %arg1, %c1_i32_0 : i32
    %c4_i32_1 = arith.constant 4 : i32
    %3 = arith.muli %2, %c4_i32_1 : i32
    %c0_i32 = arith.constant 0 : i32
    %4 = arith.cmpi sgt, %arg1, %c0_i32 : i32
    %c3_i32 = arith.constant 3 : i32
    %5 = arith.cmpi slt, %arg1, %c3_i32 : i32
    %6 = arith.extui %4 : i1 to i32
    %c0_i32_2 = arith.constant 0 : i32
    %7 = arith.cmpi ne, %6, %c0_i32_2 : i32
    scf.if %7 {
      %c0_i32_92 = arith.constant 0 : i32
      %c0_i32_93 = arith.constant 0 : i32
      %c0_i32_94 = arith.constant 0 : i32
      %137 = tpu.memref_slice %arg3[%arg0, %1, %c0_i32_93, %c0_i32_94] : memref<2x16x16x128xf32, #tpu.memory_space<any>> -> memref<1x1x16x128xf32, #tpu.memory_space<any>>
      %138 = tpu.memref_squeeze %137 : memref<1x1x16x128xf32, #tpu.memory_space<any>> -> memref<1x16x128xf32, #tpu.memory_space<any>>
      %c0_i32_95 = arith.constant 0 : i32
      %c0_i32_96 = arith.constant 0 : i32
      %c0_i32_97 = arith.constant 0 : i32
      %139 = tpu.memref_slice %arg11[%c0_i32_95, %c0_i32_96, %c0_i32_97] : memref<2x16x128xf32, #tpu.memory_space<vmem>> -> memref<1x16x128xf32, #tpu.memory_space<vmem>>
      %140 = tpu.memref_slice %arg13[%c0_i32_92] : memref<2x!tpu.dma_semaphore, #tpu.memory_space<semaphore_mem>> -> memref<1x!tpu.dma_semaphore, #tpu.memory_space<semaphore_mem>>
      %141 = tpu.memref_squeeze %140 : memref<1x!tpu.dma_semaphore, #tpu.memory_space<semaphore_mem>> -> memref<!tpu.dma_semaphore, #tpu.memory_space<semaphore_mem>>
      tpu.enqueue_dma source(%138 : memref<1x16x128xf32, #tpu.memory_space<any>>) target(%139 : memref<1x16x128xf32, #tpu.memory_space<vmem>>) target_semaphore(%141 : memref<!tpu.dma_semaphore, #tpu.memory_space<semaphore_mem>>)
    } else {
    }
    %8 = arith.extui %5 : i1 to i32
    %c0_i32_3 = arith.constant 0 : i32
    %9 = arith.cmpi ne, %8, %c0_i32_3 : i32
    scf.if %9 {
      %c1_i32_92 = arith.constant 1 : i32
      %c0_i32_93 = arith.constant 0 : i32
      %c0_i32_94 = arith.constant 0 : i32
      %137 = tpu.memref_slice %arg3[%arg0, %3, %c0_i32_93, %c0_i32_94] : memref<2x16x16x128xf32, #tpu.memory_space<any>> -> memref<1x1x16x128xf32, #tpu.memory_space<any>>
      %138 = tpu.memref_squeeze %137 : memref<1x1x16x128xf32, #tpu.memory_space<any>> -> memref<1x16x128xf32, #tpu.memory_space<any>>
      %c1_i32_95 = arith.constant 1 : i32
      %c0_i32_96 = arith.constant 0 : i32
      %c0_i32_97 = arith.constant 0 : i32
      %139 = tpu.memref_slice %arg11[%c1_i32_95, %c0_i32_96, %c0_i32_97] : memref<2x16x128xf32, #tpu.memory_space<vmem>> -> memref<1x16x128xf32, #tpu.memory_space<vmem>>
      %140 = tpu.memref_slice %arg13[%c1_i32_92] : memref<2x!tpu.dma_semaphore, #tpu.memory_space<semaphore_mem>> -> memref<1x!tpu.dma_semaphore, #tpu.memory_space<semaphore_mem>>
      %141 = tpu.memref_squeeze %140 : memref<1x!tpu.dma_semaphore, #tpu.memory_space<semaphore_mem>> -> memref<!tpu.dma_semaphore, #tpu.memory_space<semaphore_mem>>
      tpu.enqueue_dma source(%138 : memref<1x16x128xf32, #tpu.memory_space<any>>) target(%139 : memref<1x16x128xf32, #tpu.memory_space<vmem>>) target_semaphore(%141 : memref<!tpu.dma_semaphore, #tpu.memory_space<semaphore_mem>>)
    } else {
    }
    %c0 = arith.constant 0 : index
    %c0_4 = arith.constant 0 : index
    %c0_5 = arith.constant 0 : index
    %c0_6 = arith.constant 0 : index
    %10 = vector.load %arg2[%c0, %c0_4, %c0_5, %c0_6] : memref<1x4x16x128xf32, #tpu.memory_space<vmem>>, vector<1x4x16x128xf32>
    %11 = vector.shape_cast %10 : vector<1x4x16x128xf32> to vector<64x128xf32>
    %12 = arith.truncf %11 : vector<64x128xf32> to vector<64x128xbf16>
    %c0_7 = arith.constant 0 : index
    %c0_8 = arith.constant 0 : index
    %13 = vector.load %arg4[%c0_7, %c0_8] : memref<128x32xbf16, #tpu.memory_space<vmem>>, vector<128x32xbf16>
    %cst = arith.constant dense<0.000000e+00> : vector<64x32xf32>
    %14 = tpu.matmul %12, %13, %cst {dimension_numbers = #tpu.dot_dimension_numbers<[1], [0], [0], [1], [0, 0, 1, 1], [], []>} : vector<64x128xbf16>, vector<128x32xbf16>, vector<64x32xf32> -> vector<64x32xf32>
    %c0_9 = arith.constant 0 : index
    %c0_10 = arith.constant 0 : index
    %15 = vector.load %arg5[%c0_9, %c0_10] : memref<1x32xf32, #tpu.memory_space<vmem>>, vector<1x32xf32>
    %16 = vector.broadcast %15 : vector<1x32xf32> to vector<64x32xf32>
    %17 = arith.addf %14, %16 : vector<64x32xf32>
    %cst_11 = arith.constant 0.000000e+00 : f32
    %18 = vector.broadcast %cst_11 : f32 to vector<64x32xf32>
    %19 = arith.cmpf oge, %17, %18 : vector<64x32xf32>
    %cst_12 = arith.constant 1.000000e-01 : f32
    %20 = vector.broadcast %cst_12 : f32 to vector<64x32xf32>
    %21 = arith.mulf %20, %17 : vector<64x32xf32>
    %22 = arith.select %19, %17, %21 : vector<64x32xi1>, vector<64x32xf32>
    %23 = vector.shape_cast %22 : vector<64x32xf32> to vector<4x16x32xf32>
    %c1 = arith.constant 1 : index
    %c0_13 = arith.constant 0 : index
    %c0_14 = arith.constant 0 : index
    %24 = vector.load %arg12[%c1, %c0_13, %c0_14] : memref<6x16x32xf32, #tpu.memory_space<vmem>>, vector<4x16x32xf32>
    tpu.vector_store %arg12[%c1, %c0_13, %c0_14], %23 {strides = array<i32>} : memref<6x16x32xf32, #tpu.memory_space<vmem>>, vector<4x16x32xf32>,
    %25 = arith.extui %4 : i1 to i32
    %c0_i32_15 = arith.constant 0 : i32
    %26 = arith.cmpi ne, %25, %c0_i32_15 : i32
    scf.if %26 {
      %c0_i32_92 = arith.constant 0 : i32
      %c0_i32_93 = arith.constant 0 : i32
      %c0_i32_94 = arith.constant 0 : i32
      %137 = tpu.memref_slice %arg3[%arg0, %1, %c0_i32_93, %c0_i32_94] : memref<2x16x16x128xf32, #tpu.memory_space<any>> -> memref<1x1x16x128xf32, #tpu.memory_space<any>>
      %138 = tpu.memref_squeeze %137 : memref<1x1x16x128xf32, #tpu.memory_space<any>> -> memref<1x16x128xf32, #tpu.memory_space<any>>
      %c0_i32_95 = arith.constant 0 : i32
      %c0_i32_96 = arith.constant 0 : i32
      %c0_i32_97 = arith.constant 0 : i32
      %139 = tpu.memref_slice %arg11[%c0_i32_95, %c0_i32_96, %c0_i32_97] : memref<2x16x128xf32, #tpu.memory_space<vmem>> -> memref<1x16x128xf32, #tpu.memory_space<vmem>>
      %140 = tpu.memref_slice %arg13[%c0_i32_92] : memref<2x!tpu.dma_semaphore, #tpu.memory_space<semaphore_mem>> -> memref<1x!tpu.dma_semaphore, #tpu.memory_space<semaphore_mem>>
      %141 = tpu.memref_squeeze %140 : memref<1x!tpu.dma_semaphore, #tpu.memory_space<semaphore_mem>> -> memref<!tpu.dma_semaphore, #tpu.memory_space<semaphore_mem>>
      tpu.wait_dma2 semaphore(%141 : memref<!tpu.dma_semaphore, #tpu.memory_space<semaphore_mem>>) src(%138 : memref<1x16x128xf32, #tpu.memory_space<any>>) dst(%139 : memref<1x16x128xf32, #tpu.memory_space<vmem>>)
      %c0_98 = arith.constant 0 : index
      %c0_99 = arith.constant 0 : index
      %c0_100 = arith.constant 0 : index
      %142 = vector.load %arg11[%c0_98, %c0_99, %c0_100] : memref<2x16x128xf32, #tpu.memory_space<vmem>>, vector<1x16x128xf32>
      %143 = vector.shape_cast %142 : vector<1x16x128xf32> to vector<16x128xf32>
      %144 = arith.truncf %143 : vector<16x128xf32> to vector<16x128xbf16>
      %c0_101 = arith.constant 0 : index
      %c0_102 = arith.constant 0 : index
      %145 = vector.load %arg4[%c0_101, %c0_102] : memref<128x32xbf16, #tpu.memory_space<vmem>>, vector<128x32xbf16>
      %cst_103 = arith.constant dense<0.000000e+00> : vector<16x32xf32>
      %146 = tpu.matmul %144, %145, %cst_103 {dimension_numbers = #tpu.dot_dimension_numbers<[1], [0], [0], [1], [0, 0, 1, 1], [], []>} : vector<16x128xbf16>, vector<128x32xbf16>, vector<16x32xf32> -> vector<16x32xf32>
      %c0_104 = arith.constant 0 : index
      %c0_105 = arith.constant 0 : index
      %147 = vector.load %arg5[%c0_104, %c0_105] : memref<1x32xf32, #tpu.memory_space<vmem>>, vector<1x32xf32>
      %148 = vector.broadcast %147 : vector<1x32xf32> to vector<16x32xf32>
      %149 = arith.addf %146, %148 : vector<16x32xf32>
      %cst_106 = arith.constant 0.000000e+00 : f32
      %150 = vector.broadcast %cst_106 : f32 to vector<16x32xf32>
      %151 = arith.cmpf oge, %149, %150 : vector<16x32xf32>
      %cst_107 = arith.constant 1.000000e-01 : f32
      %152 = vector.broadcast %cst_107 : f32 to vector<16x32xf32>
      %153 = arith.mulf %152, %149 : vector<16x32xf32>
      %154 = arith.select %151, %149, %153 : vector<16x32xi1>, vector<16x32xf32>
      %155 = vector.shape_cast %154 : vector<16x32xf32> to vector<1x16x32xf32>
      %c0_108 = arith.constant 0 : index
      %c0_109 = arith.constant 0 : index
      %c0_110 = arith.constant 0 : index
      %156 = vector.load %arg12[%c0_108, %c0_109, %c0_110] : memref<6x16x32xf32, #tpu.memory_space<vmem>>, vector<1x16x32xf32>
      tpu.vector_store %arg12[%c0_108, %c0_109, %c0_110], %155 {strides = array<i32>} : memref<6x16x32xf32, #tpu.memory_space<vmem>>, vector<1x16x32xf32>,
    } else {
    }
    %c0_i32_16 = arith.constant 0 : i32
    %27 = arith.cmpi eq, %arg1, %c0_i32_16 : i32
    %28 = arith.extui %27 : i1 to i32
    %c0_i32_17 = arith.constant 0 : i32
    %29 = arith.cmpi ne, %28, %c0_i32_17 : i32
    scf.if %29 {
      %cst_92 = arith.constant 0.000000e+00 : f32
      %137 = vector.broadcast %cst_92 : f32 to vector<1x16x32xf32>
      %c0_93 = arith.constant 0 : index
      %c0_94 = arith.constant 0 : index
      %c0_95 = arith.constant 0 : index
      %138 = vector.load %arg12[%c0_93, %c0_94, %c0_95] : memref<6x16x32xf32, #tpu.memory_space<vmem>>, vector<1x16x32xf32>
      tpu.vector_store %arg12[%c0_93, %c0_94, %c0_95], %137 {strides = array<i32>} : memref<6x16x32xf32, #tpu.memory_space<vmem>>, vector<1x16x32xf32>,
    } else {
    }
    %30 = arith.extui %5 : i1 to i32
    %c0_i32_18 = arith.constant 0 : i32
    %31 = arith.cmpi ne, %30, %c0_i32_18 : i32
    scf.if %31 {
      %c1_i32_92 = arith.constant 1 : i32
      %c0_i32_93 = arith.constant 0 : i32
      %c0_i32_94 = arith.constant 0 : i32
      %137 = tpu.memref_slice %arg3[%arg0, %3, %c0_i32_93, %c0_i32_94] : memref<2x16x16x128xf32, #tpu.memory_space<any>> -> memref<1x1x16x128xf32, #tpu.memory_space<any>>
      %138 = tpu.memref_squeeze %137 : memref<1x1x16x128xf32, #tpu.memory_space<any>> -> memref<1x16x128xf32, #tpu.memory_space<any>>
      %c1_i32_95 = arith.constant 1 : i32
      %c0_i32_96 = arith.constant 0 : i32
      %c0_i32_97 = arith.constant 0 : i32
      %139 = tpu.memref_slice %arg11[%c1_i32_95, %c0_i32_96, %c0_i32_97] : memref<2x16x128xf32, #tpu.memory_space<vmem>> -> memref<1x16x128xf32, #tpu.memory_space<vmem>>
      %140 = tpu.memref_slice %arg13[%c1_i32_92] : memref<2x!tpu.dma_semaphore, #tpu.memory_space<semaphore_mem>> -> memref<1x!tpu.dma_semaphore, #tpu.memory_space<semaphore_mem>>
      %141 = tpu.memref_squeeze %140 : memref<1x!tpu.dma_semaphore, #tpu.memory_space<semaphore_mem>> -> memref<!tpu.dma_semaphore, #tpu.memory_space<semaphore_mem>>
      tpu.wait_dma2 semaphore(%141 : memref<!tpu.dma_semaphore, #tpu.memory_space<semaphore_mem>>) src(%138 : memref<1x16x128xf32, #tpu.memory_space<any>>) dst(%139 : memref<1x16x128xf32, #tpu.memory_space<vmem>>)
      %c1_98 = arith.constant 1 : index
      %c0_99 = arith.constant 0 : index
      %c0_100 = arith.constant 0 : index
      %142 = vector.load %arg11[%c1_98, %c0_99, %c0_100] : memref<2x16x128xf32, #tpu.memory_space<vmem>>, vector<1x16x128xf32>
      %143 = vector.shape_cast %142 : vector<1x16x128xf32> to vector<16x128xf32>
      %144 = arith.truncf %143 : vector<16x128xf32> to vector<16x128xbf16>
      %c0_101 = arith.constant 0 : index
      %c0_102 = arith.constant 0 : index
      %145 = vector.load %arg4[%c0_101, %c0_102] : memref<128x32xbf16, #tpu.memory_space<vmem>>, vector<128x32xbf16>
      %cst_103 = arith.constant dense<0.000000e+00> : vector<16x32xf32>
      %146 = tpu.matmul %144, %145, %cst_103 {dimension_numbers = #tpu.dot_dimension_numbers<[1], [0], [0], [1], [0, 0, 1, 1], [], []>} : vector<16x128xbf16>, vector<128x32xbf16>, vector<16x32xf32> -> vector<16x32xf32>
      %c0_104 = arith.constant 0 : index
      %c0_105 = arith.constant 0 : index
      %147 = vector.load %arg5[%c0_104, %c0_105] : memref<1x32xf32, #tpu.memory_space<vmem>>, vector<1x32xf32>
      %148 = vector.broadcast %147 : vector<1x32xf32> to vector<16x32xf32>
      %149 = arith.addf %146, %148 : vector<16x32xf32>
      %cst_106 = arith.constant 0.000000e+00 : f32
      %150 = vector.broadcast %cst_106 : f32 to vector<16x32xf32>
      %151 = arith.cmpf oge, %149, %150 : vector<16x32xf32>
      %cst_107 = arith.constant 1.000000e-01 : f32
      %152 = vector.broadcast %cst_107 : f32 to vector<16x32xf32>
      %153 = arith.mulf %152, %149 : vector<16x32xf32>
      %154 = arith.select %151, %149, %153 : vector<16x32xi1>, vector<16x32xf32>
      %155 = vector.shape_cast %154 : vector<16x32xf32> to vector<1x16x32xf32>
      %c5 = arith.constant 5 : index
      %c0_108 = arith.constant 0 : index
      %c0_109 = arith.constant 0 : index
      %156 = vector.load %arg12[%c5, %c0_108, %c0_109] : memref<6x16x32xf32, #tpu.memory_space<vmem>>, vector<1x16x32xf32>
      tpu.vector_store %arg12[%c5, %c0_108, %c0_109], %155 {strides = array<i32>} : memref<6x16x32xf32, #tpu.memory_space<vmem>>, vector<1x16x32xf32>,
    } else {
    }
    %c3_i32_19 = arith.constant 3 : i32
    %32 = arith.cmpi eq, %arg1, %c3_i32_19 : i32
    %33 = arith.extui %32 : i1 to i32
    %c0_i32_20 = arith.constant 0 : i32
    %34 = arith.cmpi ne, %33, %c0_i32_20 : i32
    scf.if %34 {
      %cst_92 = arith.constant 0.000000e+00 : f32
      %137 = vector.broadcast %cst_92 : f32 to vector<1x16x32xf32>
      %c5 = arith.constant 5 : index
      %c0_93 = arith.constant 0 : index
      %c0_94 = arith.constant 0 : index
      %138 = vector.load %arg12[%c5, %c0_93, %c0_94] : memref<6x16x32xf32, #tpu.memory_space<vmem>>, vector<1x16x32xf32>
      tpu.vector_store %arg12[%c5, %c0_93, %c0_94], %137 {strides = array<i32>} : memref<6x16x32xf32, #tpu.memory_space<vmem>>, vector<1x16x32xf32>,
    } else {
    }
    %c0_21 = arith.constant 0 : index
    %c0_22 = arith.constant 0 : index
    %c0_23 = arith.constant 0 : index
    %35 = vector.load %arg12[%c0_21, %c0_22, %c0_23] : memref<6x16x32xf32, #tpu.memory_space<vmem>>, vector<6x16x32xf32>
    %36 = vector.shape_cast %35 : vector<6x16x32xf32> to vector<96x32xf32>
    %37 = tpu.iota {dimensions = array<i32: 0>} : vector<96x1xi32>
    %c16_i32 = arith.constant 16 : i32
    %c0_i32_24 = arith.constant 0 : i32
    %38 = arith.cmpi eq, %c16_i32, %c0_i32_24 : i32
    %c1_i32_25 = arith.constant 1 : i32
    %39 = arith.select %38, %c1_i32_25, %c16_i32 : i32
    %40 = vector.broadcast %39 : i32 to vector<96x1xi32>
    %41 = arith.remsi %37, %40 : vector<96x1xi32>
    %c0_i32_26 = arith.constant 0 : i32
    %42 = vector.broadcast %c0_i32_26 : i32 to vector<96x1xi32>
    %43 = arith.cmpi ne, %41, %42 : vector<96x1xi32>
    %c0_i32_27 = arith.constant 0 : i32
    %44 = vector.broadcast %c0_i32_27 : i32 to vector<96x1xi32>
    %45 = arith.cmpi slt, %41, %44 : vector<96x1xi32>
    %c0_i32_28 = arith.constant 0 : i32
    %46 = arith.cmpi slt, %39, %c0_i32_28 : i32
    %47 = vector.broadcast %46 : i1 to vector<96x1xi1>
    %48 = vector.broadcast %47 : vector<96x1xi1> to vector<96x1xi1>
    %49 = arith.xori %45, %48 : vector<96x1xi1>
    %50 = arith.andi %49, %43 : vector<96x1xi1>
    %51 = vector.broadcast %39 : i32 to vector<96x1xi32>
    %52 = arith.addi %41, %51 : vector<96x1xi32>
    %53 = arith.select %50, %52, %41 : vector<96x1xi1>, vector<96x1xi32>
    %c0_i32_29 = arith.constant 0 : i32
    %54 = vector.broadcast %c0_i32_29 : i32 to vector<96x1xi32>
    %55 = arith.cmpi ne, %53, %54 : vector<96x1xi32>
    %c1_i32_30 = arith.constant 1 : i32
    %56 = tpu.dynamic_rotate %36 by %c1_i32_30 dim 0 : vector<96x32xf32>, i32 -> vector<96x32xf32>
    %cst_31 = arith.constant 0.000000e+00 : f32
    %57 = vector.shape_cast %55 : vector<96x1xi1> to vector<96x1xi1>
    %58 = vector.broadcast %57 : vector<96x1xi1> to vector<96x32xi1>
    %59 = vector.broadcast %cst_31 : f32 to vector<96x32xf32>
    %60 = arith.select %58, %56, %59 : vector<96x32xi1>, vector<96x32xf32>
    %c15_i32 = arith.constant 15 : i32
    %61 = vector.broadcast %c15_i32 : i32 to vector<96x1xi32>
    %62 = arith.cmpi ne, %53, %61 : vector<96x1xi32>
    %c95_i32 = arith.constant 95 : i32
    %63 = tpu.dynamic_rotate %36 by %c95_i32 dim 0 : vector<96x32xf32>, i32 -> vector<96x32xf32>
    %cst_32 = arith.constant 0.000000e+00 : f32
    %64 = vector.shape_cast %62 : vector<96x1xi1> to vector<96x1xi1>
    %65 = vector.broadcast %64 : vector<96x1xi1> to vector<96x32xi1>
    %66 = vector.broadcast %cst_32 : f32 to vector<96x32xf32>
    %67 = arith.select %65, %63, %66 : vector<96x32xi1>, vector<96x32xf32>
    %68 = arith.truncf %60 : vector<96x32xf32> to vector<96x32xbf16>
    %69 = arith.truncf %36 : vector<96x32xf32> to vector<96x32xbf16>
    %70 = arith.truncf %67 : vector<96x32xf32> to vector<96x32xbf16>
    %71 = vector.extract_strided_slice %68 {offsets = [0, 0], sizes = [64, 32], strides = [1, 1]} : vector<96x32xbf16> to vector<64x32xbf16>
    %c0_33 = arith.constant 0 : index
    %c0_34 = arith.constant 0 : index
    %c0_35 = arith.constant 0 : index
    %c0_36 = arith.constant 0 : index
    %72 = vector.load %arg6[%c0_33, %c0_34, %c0_35, %c0_36] : memref<3x3x32x32xbf16, #tpu.memory_space<vmem>>, vector<1x1x32x32xbf16>
    %73 = vector.shape_cast %72 : vector<1x1x32x32xbf16> to vector<32x32xbf16>
    %cst_37 = arith.constant dense<0.000000e+00> : vector<64x32xf32>
    %74 = tpu.matmul %71, %73, %cst_37 {dimension_numbers = #tpu.dot_dimension_numbers<[1], [0], [0], [1], [0, 0, 1, 1], [], []>} : vector<64x32xbf16>, vector<32x32xbf16>, vector<64x32xf32> -> vector<64x32xf32>
    %75 = vector.extract_strided_slice %69 {offsets = [0, 0], sizes = [64, 32], strides = [1, 1]} : vector<96x32xbf16> to vector<64x32xbf16>
    %c0_38 = arith.constant 0 : index
    %c1_39 = arith.constant 1 : index
    %c0_40 = arith.constant 0 : index
    %c0_41 = arith.constant 0 : index
    %76 = vector.load %arg6[%c0_38, %c1_39, %c0_40, %c0_41] : memref<3x3x32x32xbf16, #tpu.memory_space<vmem>>, vector<1x1x32x32xbf16>
    %77 = vector.shape_cast %76 : vector<1x1x32x32xbf16> to vector<32x32xbf16>
    %cst_42 = arith.constant dense<0.000000e+00> : vector<64x32xf32>
    %78 = tpu.matmul %75, %77, %cst_42 {dimension_numbers = #tpu.dot_dimension_numbers<[1], [0], [0], [1], [0, 0, 1, 1], [], []>} : vector<64x32xbf16>, vector<32x32xbf16>, vector<64x32xf32> -> vector<64x32xf32>
    %79 = arith.addf %74, %78 : vector<64x32xf32>
    %80 = vector.extract_strided_slice %70 {offsets = [0, 0], sizes = [64, 32], strides = [1, 1]} : vector<96x32xbf16> to vector<64x32xbf16>
    %c0_43 = arith.constant 0 : index
    %c2 = arith.constant 2 : index
    %c0_44 = arith.constant 0 : index
    %c0_45 = arith.constant 0 : index
    %81 = vector.load %arg6[%c0_43, %c2, %c0_44, %c0_45] : memref<3x3x32x32xbf16, #tpu.memory_space<vmem>>, vector<1x1x32x32xbf16>
    %82 = vector.shape_cast %81 : vector<1x1x32x32xbf16> to vector<32x32xbf16>
    %cst_46 = arith.constant dense<0.000000e+00> : vector<64x32xf32>
    %83 = tpu.matmul %80, %82, %cst_46 {dimension_numbers = #tpu.dot_dimension_numbers<[1], [0], [0], [1], [0, 0, 1, 1], [], []>} : vector<64x32xbf16>, vector<32x32xbf16>, vector<64x32xf32> -> vector<64x32xf32>
    %84 = arith.addf %79, %83 : vector<64x32xf32>
    %85 = vector.extract_strided_slice %68 {offsets = [16, 0], sizes = [64, 32], strides = [1, 1]} : vector<96x32xbf16> to vector<64x32xbf16>
    %c1_47 = arith.constant 1 : index
    %c0_48 = arith.constant 0 : index
    %c0_49 = arith.constant 0 : index
    %c0_50 = arith.constant 0 : index
    %86 = vector.load %arg6[%c1_47, %c0_48, %c0_49, %c0_50] : memref<3x3x32x32xbf16, #tpu.memory_space<vmem>>, vector<1x1x32x32xbf16>
    %87 = vector.shape_cast %86 : vector<1x1x32x32xbf16> to vector<32x32xbf16>
    %cst_51 = arith.constant dense<0.000000e+00> : vector<64x32xf32>
    %88 = tpu.matmul %85, %87, %cst_51 {dimension_numbers = #tpu.dot_dimension_numbers<[1], [0], [0], [1], [0, 0, 1, 1], [], []>} : vector<64x32xbf16>, vector<32x32xbf16>, vector<64x32xf32> -> vector<64x32xf32>
    %89 = arith.addf %84, %88 : vector<64x32xf32>
    %90 = vector.extract_strided_slice %69 {offsets = [16, 0], sizes = [64, 32], strides = [1, 1]} : vector<96x32xbf16> to vector<64x32xbf16>
    %c1_52 = arith.constant 1 : index
    %c1_53 = arith.constant 1 : index
    %c0_54 = arith.constant 0 : index
    %c0_55 = arith.constant 0 : index
    %91 = vector.load %arg6[%c1_52, %c1_53, %c0_54, %c0_55] : memref<3x3x32x32xbf16, #tpu.memory_space<vmem>>, vector<1x1x32x32xbf16>
    %92 = vector.shape_cast %91 : vector<1x1x32x32xbf16> to vector<32x32xbf16>
    %cst_56 = arith.constant dense<0.000000e+00> : vector<64x32xf32>
    %93 = tpu.matmul %90, %92, %cst_56 {dimension_numbers = #tpu.dot_dimension_numbers<[1], [0], [0], [1], [0, 0, 1, 1], [], []>} : vector<64x32xbf16>, vector<32x32xbf16>, vector<64x32xf32> -> vector<64x32xf32>
    %94 = arith.addf %89, %93 : vector<64x32xf32>
    %95 = vector.extract_strided_slice %70 {offsets = [16, 0], sizes = [64, 32], strides = [1, 1]} : vector<96x32xbf16> to vector<64x32xbf16>
    %c1_57 = arith.constant 1 : index
    %c2_58 = arith.constant 2 : index
    %c0_59 = arith.constant 0 : index
    %c0_60 = arith.constant 0 : index
    %96 = vector.load %arg6[%c1_57, %c2_58, %c0_59, %c0_60] : memref<3x3x32x32xbf16, #tpu.memory_space<vmem>>, vector<1x1x32x32xbf16>
    %97 = vector.shape_cast %96 : vector<1x1x32x32xbf16> to vector<32x32xbf16>
    %cst_61 = arith.constant dense<0.000000e+00> : vector<64x32xf32>
    %98 = tpu.matmul %95, %97, %cst_61 {dimension_numbers = #tpu.dot_dimension_numbers<[1], [0], [0], [1], [0, 0, 1, 1], [], []>} : vector<64x32xbf16>, vector<32x32xbf16>, vector<64x32xf32> -> vector<64x32xf32>
    %99 = arith.addf %94, %98 : vector<64x32xf32>
    %100 = vector.extract_strided_slice %68 {offsets = [32, 0], sizes = [64, 32], strides = [1, 1]} : vector<96x32xbf16> to vector<64x32xbf16>
    %c2_62 = arith.constant 2 : index
    %c0_63 = arith.constant 0 : index
    %c0_64 = arith.constant 0 : index
    %c0_65 = arith.constant 0 : index
    %101 = vector.load %arg6[%c2_62, %c0_63, %c0_64, %c0_65] : memref<3x3x32x32xbf16, #tpu.memory_space<vmem>>, vector<1x1x32x32xbf16>
    %102 = vector.shape_cast %101 : vector<1x1x32x32xbf16> to vector<32x32xbf16>
    %cst_66 = arith.constant dense<0.000000e+00> : vector<64x32xf32>
    %103 = tpu.matmul %100, %102, %cst_66 {dimension_numbers = #tpu.dot_dimension_numbers<[1], [0], [0], [1], [0, 0, 1, 1], [], []>} : vector<64x32xbf16>, vector<32x32xbf16>, vector<64x32xf32> -> vector<64x32xf32>
    %104 = arith.addf %99, %103 : vector<64x32xf32>
    %105 = vector.extract_strided_slice %69 {offsets = [32, 0], sizes = [64, 32], strides = [1, 1]} : vector<96x32xbf16> to vector<64x32xbf16>
    %c2_67 = arith.constant 2 : index
    %c1_68 = arith.constant 1 : index
    %c0_69 = arith.constant 0 : index
    %c0_70 = arith.constant 0 : index
    %106 = vector.load %arg6[%c2_67, %c1_68, %c0_69, %c0_70] : memref<3x3x32x32xbf16, #tpu.memory_space<vmem>>, vector<1x1x32x32xbf16>
    %107 = vector.shape_cast %106 : vector<1x1x32x32xbf16> to vector<32x32xbf16>
    %cst_71 = arith.constant dense<0.000000e+00> : vector<64x32xf32>
    %108 = tpu.matmul %105, %107, %cst_71 {dimension_numbers = #tpu.dot_dimension_numbers<[1], [0], [0], [1], [0, 0, 1, 1], [], []>} : vector<64x32xbf16>, vector<32x32xbf16>, vector<64x32xf32> -> vector<64x32xf32>
    %109 = arith.addf %104, %108 : vector<64x32xf32>
    %110 = vector.extract_strided_slice %70 {offsets = [32, 0], sizes = [64, 32], strides = [1, 1]} : vector<96x32xbf16> to vector<64x32xbf16>
    %c2_72 = arith.constant 2 : index
    %c2_73 = arith.constant 2 : index
    %c0_74 = arith.constant 0 : index
    %c0_75 = arith.constant 0 : index
    %111 = vector.load %arg6[%c2_72, %c2_73, %c0_74, %c0_75] : memref<3x3x32x32xbf16, #tpu.memory_space<vmem>>, vector<1x1x32x32xbf16>
    %112 = vector.shape_cast %111 : vector<1x1x32x32xbf16> to vector<32x32xbf16>
    %cst_76 = arith.constant dense<0.000000e+00> : vector<64x32xf32>
    %113 = tpu.matmul %110, %112, %cst_76 {dimension_numbers = #tpu.dot_dimension_numbers<[1], [0], [0], [1], [0, 0, 1, 1], [], []>} : vector<64x32xbf16>, vector<32x32xbf16>, vector<64x32xf32> -> vector<64x32xf32>
    %114 = arith.addf %109, %113 : vector<64x32xf32>
    %c0_77 = arith.constant 0 : index
    %c0_78 = arith.constant 0 : index
    %115 = vector.load %arg7[%c0_77, %c0_78] : memref<1x32xf32, #tpu.memory_space<vmem>>, vector<1x32xf32>
    %116 = vector.broadcast %115 : vector<1x32xf32> to vector<64x32xf32>
    %117 = arith.addf %114, %116 : vector<64x32xf32>
    %cst_79 = arith.constant 0.000000e+00 : f32
    %118 = vector.broadcast %cst_79 : f32 to vector<64x32xf32>
    %119 = arith.cmpf oge, %117, %118 : vector<64x32xf32>
    %cst_80 = arith.constant 1.000000e-01 : f32
    %120 = vector.broadcast %cst_80 : f32 to vector<64x32xf32>
    %121 = arith.mulf %120, %117 : vector<64x32xf32>
    %122 = arith.select %119, %117, %121 : vector<64x32xi1>, vector<64x32xf32>
    %123 = arith.truncf %122 : vector<64x32xf32> to vector<64x32xbf16>
    %c0_81 = arith.constant 0 : index
    %c0_82 = arith.constant 0 : index
    %124 = vector.load %arg8[%c0_81, %c0_82] : memref<32x128xbf16, #tpu.memory_space<vmem>>, vector<32x128xbf16>
    %cst_83 = arith.constant dense<0.000000e+00> : vector<64x128xf32>
    %125 = tpu.matmul %123, %124, %cst_83 {dimension_numbers = #tpu.dot_dimension_numbers<[1], [0], [0], [1], [0, 0, 1, 1], [], []>} : vector<64x32xbf16>, vector<32x128xbf16>, vector<64x128xf32> -> vector<64x128xf32>
    %c0_84 = arith.constant 0 : index
    %c0_85 = arith.constant 0 : index
    %126 = vector.load %arg9[%c0_84, %c0_85] : memref<1x128xf32, #tpu.memory_space<vmem>>, vector<1x128xf32>
    %127 = vector.broadcast %126 : vector<1x128xf32> to vector<64x128xf32>
    %128 = arith.addf %125, %127 : vector<64x128xf32>
    %129 = arith.addf %128, %11 : vector<64x128xf32>
    %cst_86 = arith.constant 0.000000e+00 : f32
    %130 = vector.broadcast %cst_86 : f32 to vector<64x128xf32>
    %131 = arith.cmpf oge, %129, %130 : vector<64x128xf32>
    %cst_87 = arith.constant 1.000000e-01 : f32
    %132 = vector.broadcast %cst_87 : f32 to vector<64x128xf32>
    %133 = arith.mulf %132, %129 : vector<64x128xf32>
    %134 = arith.select %131, %129, %133 : vector<64x128xi1>, vector<64x128xf32>
    %135 = vector.shape_cast %134 : vector<64x128xf32> to vector<1x4x16x128xf32>
    %c0_88 = arith.constant 0 : index
    %c0_89 = arith.constant 0 : index
    %c0_90 = arith.constant 0 : index
    %c0_91 = arith.constant 0 : index
    %136 = vector.load %arg10[%c0_88, %c0_89, %c0_90, %c0_91] : memref<1x4x16x128xf32, #tpu.memory_space<vmem>>, vector<1x4x16x128xf32>
    tpu.vector_store %arg10[%c0_88, %c0_89, %c0_90, %c0_91], %135 {strides = array<i32>} : memref<1x4x16x128xf32, #tpu.memory_space<vmem>>, vector<1x4x16x128xf32>,
    return
  }
  func.func @transform_0(%arg0: i32, %arg1: i32) -> (i32, i32, i32, i32) {
    %c0_i32 = arith.constant 0 : i32
    %c0_i32_0 = arith.constant 0 : i32
    %c0_i32_1 = arith.constant 0 : i32
    return %arg0, %arg1, %c0_i32, %c0_i32_0 : i32, i32, i32, i32
  }
  func.func @transform_2(%arg0: i32, %arg1: i32) -> (i32, i32) {
    %c0_i32 = arith.constant 0 : i32
    %c0_i32_0 = arith.constant 0 : i32
    %c0_i32_1 = arith.constant 0 : i32
    return %c0_i32, %c0_i32_0 : i32, i32
  }
  func.func @transform_3(%arg0: i32, %arg1: i32) -> (i32, i32) {
    %c0_i32 = arith.constant 0 : i32
    %c0_i32_0 = arith.constant 0 : i32
    %c0_i32_1 = arith.constant 0 : i32
    return %c0_i32, %c0_i32_0 : i32, i32
  }
  func.func @transform_4(%arg0: i32, %arg1: i32) -> (i32, i32, i32, i32) {
    %c0_i32 = arith.constant 0 : i32
    %c0_i32_0 = arith.constant 0 : i32
    %c0_i32_1 = arith.constant 0 : i32
    %c0_i32_2 = arith.constant 0 : i32
    %c0_i32_3 = arith.constant 0 : i32
    return %c0_i32, %c0_i32_0, %c0_i32_1, %c0_i32_2 : i32, i32, i32, i32
  }
  func.func @transform_5(%arg0: i32, %arg1: i32) -> (i32, i32) {
    %c0_i32 = arith.constant 0 : i32
    %c0_i32_0 = arith.constant 0 : i32
    %c0_i32_1 = arith.constant 0 : i32
    return %c0_i32, %c0_i32_0 : i32, i32
  }
  func.func @transform_6(%arg0: i32, %arg1: i32) -> (i32, i32) {
    %c0_i32 = arith.constant 0 : i32
    %c0_i32_0 = arith.constant 0 : i32
    %c0_i32_1 = arith.constant 0 : i32
    return %c0_i32, %c0_i32_0 : i32, i32
  }
  func.func @transform_7(%arg0: i32, %arg1: i32) -> (i32, i32) {
    %c0_i32 = arith.constant 0 : i32
    %c0_i32_0 = arith.constant 0 : i32
    %c0_i32_1 = arith.constant 0 : i32
    return %c0_i32, %c0_i32_0 : i32, i32
  }
  func.func @transform_8(%arg0: i32, %arg1: i32) -> (i32, i32, i32, i32) {
    %c0_i32 = arith.constant 0 : i32
    %c0_i32_0 = arith.constant 0 : i32
    %c0_i32_1 = arith.constant 0 : i32
    return %arg0, %arg1, %c0_i32, %c0_i32_0 : i32, i32, i32, i32
  }
}

</mosaic_0001>

<llo_original>
// kernel: tpu_custom_call.1
$region0: #{tpu_custom_call.1}
  #allocation0 [shape = 'u32[]', space=smem, size = 0x4, offset = 0x4, fixed_abs, tag = 'smem constant byte address 0x4 - core index']
  #allocation1 [shape = 'u32[144,128]{1,0:T(1,128)}', space=vmem, size = 0x12000, scoped, tag = 'internal scratch']
  #allocation2 [shape = 'f32[2,16,128]{2,1,0:T(8,128)}', space=vmem, size = 0x4000, scoped, tag = 'scratch operand']
  #allocation3 [shape = 'f32[6,16,32]{2,1,0:T(8,128)}', space=vmem, size = 0xc000, scoped, tag = 'scratch operand']
  #allocation4 [shape = 's32[2]{0}', space=sflag, size = 0x8, scoped, tag = 'scratch operand']
  #allocation11 [shape = 's32[]', space=sflag, size = 0x4, offset = 0, fixed_abs, tag = 'sflag constant byte address 0x0 - dummy sync flag']
  #allocation12 [shape = 's32[]', space=sflag, size = 0x4, offset = 0, fixed_abs, tag = 'sflag constant byte address 0x0 - dummy sync flag']
  #allocation13 [shape = 'u32[]', space=smem, size = 0x4, offset = 0x44, fixed_abs, tag = 'smem constant byte address 0x44 - assertion arg 0']
  #allocation14 [shape = 'u32[]', space=smem, size = 0x4, offset = 0x48, fixed_abs, tag = 'smem constant byte address 0x48 - assertion arg 1']
  #allocation15 [shape = 's32[]', space=sflag, size = 0x4, offset = 0, fixed_abs, tag = 'sflag constant byte address 0x0 - dummy sync flag']
  #allocation16 [shape = 's32[]', space=sflag, size = 0x4, offset = 0, fixed_abs, tag = 'sflag constant byte address 0x0 - dummy sync flag']
  %s0 = inlined_call_operand.hbm [shape: f32[2,16,16,128], index: 0, kind: input, shape index: {}]
  %s1 = inlined_call_operand.hbm [shape: f32[2,16,16,128], index: 1, kind: input, shape index: {}]
  %s2 = inlined_call_operand.vmem [shape: bf16[128,32], index: 2, kind: input, shape index: {}]
  %s3 = inlined_call_operand.vmem [shape: f32[1,32], index: 3, kind: input, shape index: {}]
  %s4 = inlined_call_operand.hbm [shape: bf16[3,3,32,32], index: 4, kind: input, shape index: {}]
  %s5 = inlined_call_operand.vmem [shape: f32[1,32], index: 5, kind: input, shape index: {}]
  %s6 = inlined_call_operand.vmem [shape: bf16[32,128], index: 6, kind: input, shape index: {}]
  %s7 = inlined_call_operand.vmem [shape: f32[1,128], index: 7, kind: input, shape index: {}]
  %s8 = inlined_call_operand.hbm [shape: f32[2,16,16,128], index: 8, kind: output, shape index: {}]
  %s9 = sld [smem:[#allocation0]]
  $region101: #{tpu_custom_call.1} parent=0
    _
  %s11 = ssub.s32 1, %s9
  %s12 = scalar_select 0, %s11, %s9
  $region1: #{tpu_custom_call.1} parent=0
    #allocation5 [shape = 'u8[65536]{0}', space=vmem, size = 0x10000, scoped, tag = 'input window, operand 0']
    #allocation6 [shape = 's32[2]{0}', space=sflag, size = 0x8, scoped, tag = 'scoped memory for tpu_custom_call.1']
    #allocation7 [shape = 's32[2]{0}', space=sflag, size = 0x8, scoped, tag = 'scoped memory for tpu_custom_call.1']
    #allocation8 [shape = 'u8[73728]{0}', space=vmem, size = 0x12000, scoped, tag = 'input window, operand 4, single buffered']
    #allocation9 [shape = 's32[1]{0}', space=sflag, size = 0x4, scoped, tag = 'scoped memory for tpu_custom_call.1']
    #allocation10 [shape = 'u8[65536]{0}', space=vmem, size = 0x10000, scoped, tag = 'output window, operand 0']
    %13 = vsyncpa [#allocation6], 0
    %s14 = scalar_lea.sflag [#allocation6], 1
    %15 = vsyncpa %s14, 0
    %16 = vsyncpa [#allocation9], 0
    %17 = vsyncpa [#allocation7], 0
    %s18 = scalar_lea.sflag [#allocation7], 1
    %19 = vsyncpa %s18, 0
    loop: start=0, step=1, limit=10
    $region2: #{tpu_custom_call.1} parent=1 // loop_pre_header
      _
    $region3: #{tpu_custom_call.1} parent=1 // loop_header
      %s21 = sphi 0, %s25
      %p22 = scmp.ge.s32.totalorder %s21, 10
      %s28 = sphi 0, %s40
      %s29 = sphi 0, %s36
      %s30 = sphi 0, %s28
      %s31 = sphi 0, %s29
      %s32 = sphi 0, %s30
      %s33 = sphi 0, %s31
      %s45 = sphi 0, %s47
      %s48 = sphi 0, %s45
      %s49 = sphi 0, %s48
      %s65 = sphi 0, %s49
      %s69 = sphi 0, %s69
      %s71 = sphi 0, %s69
      %s72 = sphi 0, %s71
      %s86 = sphi 0, %s72
      %s90 = sphi 0, %s90
      %s92 = sphi 0, %s90
      %s93 = sphi 0, %s92
      %s107 = sphi 0, %s93
      %s111 = sphi 0, %s111
      %s113 = sphi 0, %s111
      %s114 = sphi 0, %s113
      %s128 = sphi 0, %s114
      %s132 = sphi 0, %s132
      %s134 = sphi 0, %s132
      %s135 = sphi 0, %s134
      %s149 = sphi 0, %s135
      %s153 = sphi 0, %s153
      %s155 = sphi 0, %s153
      %s156 = sphi 0, %s155
      %s170 = sphi 0, %s156
      %s174 = sphi 0, %s174
      %s176 = sphi 0, %s174
      %s177 = sphi 0, %s176
      %s191 = sphi 0, %s177
      %s199 = sphi 0, %s201
      %s202 = sphi 0, %s199
      %s203 = sphi 0, %s202
      %s219 = sphi 0, %s203
    $region4: #{tpu_custom_call.1} parent=1 // loop_header_branch
      %24 = sbr.rel (%p22) target = $region8
    $region5: #{tpu_custom_call.1} parent=1 // loop_body
      %s26 = ssub.s32 %s21, 1
      %s27 = ssub.s32 %s21, 2
      %s34 = sadd.s32 1, %s29
      %p35 = scmp.ge.s32.totalorder %s34, 4
      %s36 = scalar_select %p35, 0, %s34
      %s37 = sadd.s32 1, %s28
      %s38 = scalar_select %p35, %s37, %s28
      %p39 = scmp.ge.s32.totalorder %s38, 2
      %s40 = scalar_select %p39, 0, %s38
      %s41 = ssub.s32 %s28, %s40
      %s42 = ssub.s32 %s29, %s36
      %s43 = sor.u32 %s41, %s42
      %p44 = scmp.eq.s32.totalorder %s43, 0
      %s46 = sadd.s32 %s45, 1
      %s47 = scalar_select %p44, %s45, %s46
      %p50 = pneg %p44
      %p51 = scmp.eq.s32.totalorder %s21, 7
      %p52 = por %p50, %p51
      %p53 = scmp.ne.s32.totalorder %s45, %s48
      %p54 = scmp.eq.s32.totalorder %s21, 0
      %p55 = por %p53, %p54
      %p56 = scmp.ne.s32.totalorder %s45, %s48
      %p57 = scmp.eq.s32.totalorder %s26, 7
      %p58 = por %p56, %p57
      %p59 = scmp.ne.s32.totalorder %s48, %s49
      %p60 = scmp.eq.s32.totalorder %s26, 0
      %p61 = por %p59, %p60
      %p62 = scmp.ne.s32.totalorder %s48, %s49
      %p63 = scmp.eq.s32.totalorder %s27, 7
      %p64 = por %p62, %p63
      %p66 = scmp.ne.s32.totalorder %s49, %s65
      %p67 = scmp.eq.s32.totalorder %s27, 0
      %p68 = por %p66, %p67
      %s70 = sadd.s32 %s69, 1
      %p73 = scmp.eq.s32.totalorder %s21, 7
      %p74 = scmp.ne.s32.totalorder %s69, %s71
      %p75 = scmp.eq.s32.totalorder %s21, 0
      %p76 = por %p74, %p75
      %p77 = scmp.ne.s32.totalorder %s69, %s71
      %p78 = scmp.eq.s32.totalorder %s26, 7
      %p79 = por %p77, %p78
      %p80 = scmp.ne.s32.totalorder %s71, %s72
      %p81 = scmp.eq.s32.totalorder %s26, 0
      %p82 = por %p80, %p81
      %p83 = scmp.ne.s32.totalorder %s71, %s72
      %p84 = scmp.eq.s32.totalorder %s27, 7
      %p85 = por %p83, %p84
      %p87 = scmp.ne.s32.totalorder %s72, %s86
      %p88 = scmp.eq.s32.totalorder %s27, 0
      %p89 = por %p87, %p88
      %s91 = sadd.s32 %s90, 1
      %p94 = scmp.eq.s32.totalorder %s21, 7
      %p95 = scmp.ne.s32.totalorder %s90, %s92
      %p96 = scmp.eq.s32.totalorder %s21, 0
      %p97 = por %p95, %p96
      %p98 = scmp.ne.s32.totalorder %s90, %s92
      %p99 = scmp.eq.s32.totalorder %s26, 7
      %p100 = por %p98, %p99
      %p101 = scmp.ne.s32.totalorder %s92, %s93
      %p102 = scmp.eq.s32.totalorder %s26, 0
      %p103 = por %p101, %p102
      %p104 = scmp.ne.s32.totalorder %s92, %s93
      %p105 = scmp.eq.s32.totalorder %s27, 7
      %p106 = por %p104, %p105
      %p108 = scmp.ne.s32.totalorder %s93, %s107
      %p109 = scmp.eq.s32.totalorder %s27, 0
      %p110 = por %p108, %p109
      %s112 = sadd.s32 %s111, 1
      %p115 = scmp.eq.s32.totalorder %s21, 7
      %p116 = scmp.ne.s32.totalorder %s111, %s113
      %p117 = scmp.eq.s32.totalorder %s21, 0
      %p118 = por %p116, %p117
      %p119 = scmp.ne.s32.totalorder %s111, %s113
      %p120 = scmp.eq.s32.totalorder %s26, 7
      %p121 = por %p119, %p120
      %p122 = scmp.ne.s32.totalorder %s113, %s114
      %p123 = scmp.eq.s32.totalorder %s26, 0
      %p124 = por %p122, %p123
      %p125 = scmp.ne.s32.totalorder %s113, %s114
      %p126 = scmp.eq.s32.totalorder %s27, 7
      %p127 = por %p125, %p126
      %p129 = scmp.ne.s32.totalorder %s114, %s128
      %p130 = scmp.eq.s32.totalorder %s27, 0
      %p131 = por %p129, %p130
      %s133 = sadd.s32 %s132, 1
      %p136 = scmp.eq.s32.totalorder %s21, 7
      %p137 = scmp.ne.s32.totalorder %s132, %s134
      %p138 = scmp.eq.s32.totalorder %s21, 0
      %p139 = por %p137, %p138
      %p140 = scmp.ne.s32.totalorder %s132, %s134
      %p141 = scmp.eq.s32.totalorder %s26, 7
      %p142 = por %p140, %p141
      %p143 = scmp.ne.s32.totalorder %s134, %s135
      %p144 = scmp.eq.s32.totalorder %s26, 0
      %p145 = por %p143, %p144
      %p146 = scmp.ne.s32.totalorder %s134, %s135
      %p147 = scmp.eq.s32.totalorder %s27, 7
      %p148 = por %p146, %p147
      %p150 = scmp.ne.s32.totalorder %s135, %s149
      %p151 = scmp.eq.s32.totalorder %s27, 0
      %p152 = por %p150, %p151
      %s154 = sadd.s32 %s153, 1
      %p157 = scmp.eq.s32.totalorder %s21, 7
      %p158 = scmp.ne.s32.totalorder %s153, %s155
      %p159 = scmp.eq.s32.totalorder %s21, 0
      %p160 = por %p158, %p159
      %p161 = scmp.ne.s32.totalorder %s153, %s155
      %p162 = scmp.eq.s32.totalorder %s26, 7
      %p163 = por %p161, %p162
      %p164 = scmp.ne.s32.totalorder %s155, %s156
      %p165 = scmp.eq.s32.totalorder %s26, 0
      %p166 = por %p164, %p165
      %p167 = scmp.ne.s32.totalorder %s155, %s156
      %p168 = scmp.eq.s32.totalorder %s27, 7
      %p169 = por %p167, %p168
      %p171 = scmp.ne.s32.totalorder %s156, %s170
      %p172 = scmp.eq.s32.totalorder %s27, 0
      %p173 = por %p171, %p172
      %s175 = sadd.s32 %s174, 1
      %p178 = scmp.eq.s32.totalorder %s21, 7
      %p179 = scmp.ne.s32.totalorder %s174, %s176
      %p180 = scmp.eq.s32.totalorder %s21, 0
      %p181 = por %p179, %p180
      %p182 = scmp.ne.s32.totalorder %s174, %s176
      %p183 = scmp.eq.s32.totalorder %s26, 7
      %p184 = por %p182, %p183
      %p185 = scmp.ne.s32.totalorder %s176, %s177
      %p186 = scmp.eq.s32.totalorder %s26, 0
      %p187 = por %p185, %p186
      %p188 = scmp.ne.s32.totalorder %s176, %s177
      %p189 = scmp.eq.s32.totalorder %s27, 7
      %p190 = por %p188, %p189
      %p192 = scmp.ne.s32.totalorder %s177, %s191
      %p193 = scmp.eq.s32.totalorder %s27, 0
      %p194 = por %p192, %p193
      %s195 = ssub.s32 %s28, %s40
      %s196 = ssub.s32 %s29, %s36
      %s197 = sor.u32 %s195, %s196
      %p198 = scmp.eq.s32.totalorder %s197, 0
      %s200 = sadd.s32 %s199, 1
      %s201 = scalar_select %p198, %s199, %s200
      %p204 = pneg %p198
      %p205 = scmp.eq.s32.totalorder %s21, 7
      %p206 = por %p204, %p205
      %p207 = scmp.ne.s32.totalorder %s199, %s202
      %p208 = scmp.eq.s32.totalorder %s21, 0
      %p209 = por %p207, %p208
      %p210 = scmp.ne.s32.totalorder %s199, %s202
      %p211 = scmp.eq.s32.totalorder %s26, 7
      %p212 = por %p210, %p211
      %p213 = scmp.ne.s32.totalorder %s202, %s203
      %p214 = scmp.eq.s32.totalorder %s26, 0
      %p215 = por %p213, %p214
      %p216 = scmp.ne.s32.totalorder %s202, %s203
      %p217 = scmp.eq.s32.totalorder %s27, 7
      %p218 = por %p216, %p217
      %p220 = scmp.ne.s32.totalorder %s203, %s219
      %p221 = scmp.eq.s32.totalorder %s27, 0
      %p222 = por %p220, %p221
      %p223 = scmp.le.s32.totalorder 1, %s21
      %p224 = scmp.lt.s32.totalorder %s21, 9
      %p225 = pnand %p223, %p224
      %p226 = pneg %p225
      // Predicated region
      $region9: #{tpu_custom_call.1} parent=5 // pred_check
        _
      $region10: #{tpu_custom_call.1} parent=5 // pred_check_branch
        %228 = sbr.rel (%p225) target = $region12
      $region11: #{tpu_custom_call.1} parent=5 // pred_region
        %s229 = ssub.s32 %s21, 1
        // Predicated region
        $region13: #{tpu_custom_call.1} parent=11 // pred_check
          %p230 = pneg %p82
        $region14: #{tpu_custom_call.1} parent=11 // pred_check_branch
          %232 = sbr.rel (%p230) target = $region16
        $region15: #{tpu_custom_call.1} parent=11 // pred_region
          _
        $region16: #{tpu_custom_call.1} parent=11 // pred_fallthru
          _
        // Predicated region
        $region17: #{tpu_custom_call.1} parent=11 // pred_check
          %p233 = pneg %p103
        $region18: #{tpu_custom_call.1} parent=11 // pred_check_branch
          %235 = sbr.rel (%p233) target = $region20
        $region19: #{tpu_custom_call.1} parent=11 // pred_region
          _
        $region20: #{tpu_custom_call.1} parent=11 // pred_fallthru
          _
        // Predicated region
        $region21: #{tpu_custom_call.1} parent=11 // pred_check
          %p236 = pneg %p124
        $region22: #{tpu_custom_call.1} parent=11 // pred_check_branch
          %238 = sbr.rel (%p236) target = $region24
        $region23: #{tpu_custom_call.1} parent=11 // pred_region
          %s240 = ssub.s32 2304, 2304
          %241 = vsyncadd [#allocation9], %s240
          %s242 = sshll.u32 [#allocation8], 4
          %s243 = int_to_ptr.vmem [resolvable:$true] %s242
          %248 = dma.hbm_to_vmem [thread:$0]  %s4, 2304, %s243, [#allocation9], 64, 64, 4
        $region24: #{tpu_custom_call.1} parent=11 // pred_fallthru
          _
        // Predicated region
        $region25: #{tpu_custom_call.1} parent=11 // pred_check
          %p249 = pneg %p145
        $region26: #{tpu_custom_call.1} parent=11 // pred_check_branch
          %251 = sbr.rel (%p249) target = $region28
        $region27: #{tpu_custom_call.1} parent=11 // pred_region
          _
        $region28: #{tpu_custom_call.1} parent=11 // pred_fallthru
          _
        // Predicated region
        $region29: #{tpu_custom_call.1} parent=11 // pred_check
          %p252 = pneg %p166
        $region30: #{tpu_custom_call.1} parent=11 // pred_check_branch
          %254 = sbr.rel (%p252) target = $region32
        $region31: #{tpu_custom_call.1} parent=11 // pred_region
          _
        $region32: #{tpu_custom_call.1} parent=11 // pred_fallthru
          _
        // Predicated region
        $region33: #{tpu_custom_call.1} parent=11 // pred_check
          %p255 = pneg %p187
        $region34: #{tpu_custom_call.1} parent=11 // pred_check_branch
          %257 = sbr.rel (%p255) target = $region36
        $region35: #{tpu_custom_call.1} parent=11 // pred_region
          _
        $region36: #{tpu_custom_call.1} parent=11 // pred_fallthru
          _
      $region12: #{tpu_custom_call.1} parent=5 // pred_fallthru
        _
      %p258 = scmp.lt.s32.totalorder %s21, 8
      // Predicated region
      $region37: #{tpu_custom_call.1} parent=5 // pred_check
        %p259 = pneg %p258
      $region38: #{tpu_custom_call.1} parent=5 // pred_check_branch
        %261 = sbr.rel (%p259) target = $region40
      $region39: #{tpu_custom_call.1} parent=5 // pred_region
        // Predicated region
        $region41: #{tpu_custom_call.1} parent=39 // pred_check
          %p262 = pneg %p55
        $region42: #{tpu_custom_call.1} parent=39 // pred_check_branch
          %264 = sbr.rel (%p262) target = $region44
        $region43: #{tpu_custom_call.1} parent=39 // pred_region
          %s265 = sand.u32 %s45, 1
          %s266 = scalar_lea.sflag [#allocation6], %s265
          %s267 = sand.u32 %s45, 1
          %s268 = smul.addr %s267, 64
          %s269 = scalar_lea.vmem [#allocation5], %s268
          %s270 = smul.u32 4, %s29
          %s272 = ssub.s32 1024, 1024
          %273 = vsyncadd %s266, %s272
          %s274 = smul.addr %s270, 2
          %s275 = smul.addr %s28, 32
          %s276 = sadd.s32 %s274, %s275
          %s277 = smul.addr %s276, 128
          %s278 = scalar_lea.hbm %s0, %s277
          %s279 = sshll.u32 %s269, 4
          %s280 = int_to_ptr.vmem [resolvable:$true] %s279
          %285 = dma.hbm_to_vmem [thread:$0]  %s278, 1024, %s280, %s266, 128, 128, 8
        $region44: #{tpu_custom_call.1} parent=39 // pred_fallthru
          _
      $region40: #{tpu_custom_call.1} parent=5 // pred_fallthru
        _
      %p286 = scmp.le.s32.totalorder 1, %s21
      %p287 = scmp.lt.s32.totalorder %s21, 9
      %p288 = pnand %p286, %p287
      %p289 = pneg %p288
      // Predicated region
      $region45: #{tpu_custom_call.1} parent=5 // pred_check
        _
      $region46: #{tpu_custom_call.1} parent=5 // pred_check_branch
        %291 = sbr.rel (%p288) target = $region48
      $region47: #{tpu_custom_call.1} parent=5 // pred_region
        %s292 = ssub.s32 %s21, 1
        %s293 = sand.u32 %s48, 1
        %s294 = scalar_lea.sflag [#allocation6], %s293
        %s295 = sand.u32 %s48, 1
        %s296 = smul.addr %s295, 64
        %s297 = scalar_lea.vmem [#allocation5], %s296
        // Predicated region
        $region49: #{tpu_custom_call.1} parent=47 // pred_check
          %p298 = pneg %p61
        $region50: #{tpu_custom_call.1} parent=47 // pred_check_branch
          %300 = sbr.rel (%p298) target = $region52
        $region51: #{tpu_custom_call.1} parent=47 // pred_region
          %301 = dma.done %s294, 1024
        $region52: #{tpu_custom_call.1} parent=47 // pred_fallthru
          _
        // Predicated region
        $region53: #{tpu_custom_call.1} parent=47 // pred_check
          %p302 = pneg %p124
        $region54: #{tpu_custom_call.1} parent=47 // pred_check_branch
          %304 = sbr.rel (%p302) target = $region56
        $region55: #{tpu_custom_call.1} parent=47 // pred_region
          %305 = dma.done [#allocation9], 2304
        $region56: #{tpu_custom_call.1} parent=47 // pred_fallthru
          _
        %s306 = sand.u32 %s48, 1
        %s307 = scalar_lea.sflag [#allocation6], %s306
        %s308 = sand.u32 %s48, 1
        %s309 = smul.addr %s308, 64
        %s310 = scalar_lea.vmem [#allocation5], %s309
        %p311 = pneg %p61
        %p312 = pneg %p58
        %p313 = pneg %p82
        %p314 = pneg %p79
        %p315 = pneg %p103
        %p316 = pneg %p100
        %p317 = pneg %p124
        %p318 = pneg %p121
        %p319 = pneg %p145
        %p320 = pneg %p142
        %p321 = pneg %p166
        %p322 = pneg %p163
        %p323 = pneg %p187
        %p324 = pneg %p184
        %p325 = pneg %p215
        %p326 = pneg %p212
        %s327 = sand.u32 %s202, 1
        %s328 = scalar_lea.sflag [#allocation7], %s327
        %s329 = sand.u32 %s202, 1
        %s330 = smul.addr %s329, 64
        %s331 = scalar_lea.vmem [#allocation10], %s330
        %s332 = smul.u32 4, %s31
        %s333 = smul.u32 4, %s31
        %s335 = smul.u32 %s31, 4
        %s336 = ssub.s32 %s335, 1
        %s337 = sadd.s32 %s31, 1
        %s338 = smul.u32 %s337, 4
        %p339 = scmp.gt.s32.totalorder %s31, 0
        %p340 = scmp.lt.s32.totalorder %s31, 3
        // Predicated region
        $region57: #{tpu_custom_call.1} parent=47 // pred_check
          %p341 = pneg %p339
        $region58: #{tpu_custom_call.1} parent=47 // pred_check_branch
          %343 = sbr.rel (%p341) target = $region60
        $region59: #{tpu_custom_call.1} parent=47 // pred_region
          %s344 = smul.u32 %s336, 16
          %s345 = smul.u32 %s30, 256
          %s346 = sadd.s32 %s344, %s345
          %s347 = smul.addr %s346, 16
          %s348 = scalar_lea.hbm %s1, %s347
          // Predicated region
          $region61: #{tpu_custom_call.1} parent=59 // pred_check
            _
          $region62: #{tpu_custom_call.1} parent=59 // pred_check_branch
            %350 = sbr.rel target = $region64
          $region63: #{tpu_custom_call.1} parent=59 // pred_region
            %351 = sst [smem:[#allocation13]] [#allocation12]
            %352 = sst [smem:[#allocation14]] [#allocation11]
          $region64: #{tpu_custom_call.1} parent=59 // pred_fallthru
            _
          %354 = shalt.err (0)
          %s356 = sshll.u32 [#allocation2], 4
          %s357 = int_to_ptr.vmem [resolvable:$true] %s356
          %359 = dma.hbm_to_vmem [thread:$0]  %s348, 256, %s357, [#allocation4]
        $region60: #{tpu_custom_call.1} parent=47 // pred_fallthru
          _
        // Predicated region
        $region65: #{tpu_custom_call.1} parent=47 // pred_check
          %p360 = pneg %p340
        $region66: #{tpu_custom_call.1} parent=47 // pred_check_branch
          %362 = sbr.rel (%p360) target = $region68
        $region67: #{tpu_custom_call.1} parent=47 // pred_region
          %s363 = smul.u32 %s338, 16
          %s364 = smul.u32 %s30, 256
          %s365 = sadd.s32 %s363, %s364
          %s366 = smul.addr %s365, 16
          %s367 = scalar_lea.hbm %s1, %s366
          %s368 = scalar_lea.vmem [#allocation2], 16
          %s369 = scalar_lea.sflag [#allocation4], 1
          // Predicated region
          $region69: #{tpu_custom_call.1} parent=67 // pred_check
            _
          $region70: #{tpu_custom_call.1} parent=67 // pred_check_branch
            %371 = sbr.rel target = $region72
          $region71: #{tpu_custom_call.1} parent=67 // pred_region
            %372 = sst [smem:[#allocation13]] [#allocation16]
            %373 = sst [smem:[#allocation14]] [#allocation15]
          $region72: #{tpu_custom_call.1} parent=67 // pred_fallthru
            _
          %375 = shalt.err (0)
          %s377 = sshll.u32 %s368, 4
          %s378 = int_to_ptr.vmem [resolvable:$true] %s377
          %380 = dma.hbm_to_vmem [thread:$0]  %s367, 256, %s378, %s369
        $region68: #{tpu_custom_call.1} parent=47 // pred_fallthru
          _
        %v381 = vld [vmem:[%s297] sm:$0xff]
        %v382 = vld [vmem:[%s297 + $0x8] sm:$0xff]
        %v383 = vld [vmem:[%s297 + $0x10] sm:$0xff]
        %v384 = vld [vmem:[%s297 + $0x18] sm:$0xff]
        %v385 = vld [vmem:[%s297 + $0x20] sm:$0xff]
        %v386 = vld [vmem:[%s297 + $0x28] sm:$0xff]
        %v387 = vld [vmem:[%s297 + $0x30] sm:$0xff]
        %v388 = vld [vmem:[%s297 + $0x38] sm:$0xff]
        %v389 = vpack.c.bf16 %v382, %v381
        %v390 = vpack.c.bf16 %v384, %v383
        %v391 = vpack.c.bf16 %v386, %v385
        %v392 = vpack.c.bf16 %v388, %v387
        %v393 = vld [vmem:[%s2] sm:$0xf]
        %v394 = vld [vmem:[%s2 + $0x4] sm:$0xf]
        %v395 = vld [vmem:[%s2 + $0x8] sm:$0xf]
        %v396 = vld [vmem:[%s2 + $0xc] sm:$0xf]
        %v397 = vld [vmem:[%s2 + $0x10] sm:$0xf]
        %v398 = vld [vmem:[%s2 + $0x14] sm:$0xf]
        %v399 = vld [vmem:[%s2 + $0x18] sm:$0xf]
        %v400 = vld [vmem:[%s2 + $0x1c] sm:$0xf]
        %v401 = vld [vmem:[%s2 + $0x20] sm:$0xf]
        %v402 = vld [vmem:[%s2 + $0x24] sm:$0xf]
        %v403 = vld [vmem:[%s2 + $0x28] sm:$0xf]
        %v404 = vld [vmem:[%s2 + $0x2c] sm:$0xf]
        %v405 = vld [vmem:[%s2 + $0x30] sm:$0xf]
        %v406 = vld [vmem:[%s2 + $0x34] sm:$0xf]
        %v407 = vld [vmem:[%s2 + $0x38] sm:$0xf]
        %v408 = vld [vmem:[%s2 + $0x3c] sm:$0xf]
        %v409 = vld [vmem:[%s3] sm:$0x1]
        %v411 = vlaneseq
        %v412 = vshrl.u32 %v411, 7
        %v413 = vsub.s32 0, %v412
        %v414 = vrot.slane %v409, %v413
        %v432 = vunpack.c.l.b16 %v393
        %v433 = vunpack.c.l.b16 %v394
        %v434 = vunpack.c.l.b16 %v395
        %v435 = vunpack.c.l.b16 %v396
        %v436 = vunpack.c.l.b16 %v397
        %v437 = vunpack.c.l.b16 %v398
        %v438 = vunpack.c.l.b16 %v399
        %v439 = vunpack.c.l.b16 %v400
        %v440 = vunpack.c.l.b16 %v401
        %v441 = vunpack.c.l.b16 %v402
        %v442 = vunpack.c.l.b16 %v403
        %v443 = vunpack.c.l.b16 %v404
        %v444 = vunpack.c.l.b16 %v405
        %v445 = vunpack.c.l.b16 %v406
        %v446 = vunpack.c.l.b16 %v407
        %v447 = vunpack.c.l.b16 %v408
        %v448 = vpack.c.b16 %v433, %v432
        %v449 = vpack.c.b16 %v435, %v434
        %v450 = vpack.c.b16 %v437, %v436
        %v451 = vpack.c.b16 %v439, %v438
        %v452 = vpack.c.b16 %v441, %v440
        %v453 = vpack.c.b16 %v443, %v442
        %v454 = vpack.c.b16 %v445, %v444
        %v455 = vpack.c.b16 %v447, %v446
        %464 = vmatprep.subr.bf16.mxu0 0
        %465 = vmatpush1.bf16.msra.mxu0 %v448
        %466 = vmatprep.subr.bf16.mxu0 0
        %467 = vmatpush1.bf16.msra.mxu0 %v449
        %468 = vmatprep.subr.bf16.mxu0 0
        %469 = vmatpush1.bf16.msra.mxu0 %v450
        %470 = vmatprep.subr.bf16.mxu0 0
        %471 = vmatpush1.bf16.msra.mxu0 %v451
        %472 = vmatprep.subr.bf16.mxu0 0
        %473 = vmatpush1.bf16.msra.mxu0 %v452
        %474 = vmatprep.subr.bf16.mxu0 0
        %475 = vmatpush1.bf16.msra.mxu0 %v453
        %476 = vmatprep.subr.bf16.mxu0 0
        %477 = vmatpush1.bf16.msra.mxu0 %v454
        %478 = vmatprep.subr.bf16.mxu0 0
        %479 = vmatpush1.bf16.msra.mxu0 %v455
        %480 = vmatprep.subr.bf16.mxu0 0
        %481 = vmatpush1.bf16.msra.mxu0 0
        %482 = vmatprep.subr.bf16.mxu0 0
        %483 = vmatpush1.bf16.msra.mxu0 0
        %484 = vmatprep.subr.bf16.mxu0 0
        %485 = vmatpush1.bf16.msra.mxu0 0
        %486 = vmatprep.subr.bf16.mxu0 0
        %487 = vmatpush1.bf16.msra.mxu0 0
        %488 = vmatprep.subr.bf16.mxu0 0
        %489 = vmatpush1.bf16.msra.mxu0 0
        %490 = vmatprep.subr.bf16.mxu0 0
        %491 = vmatpush1.bf16.msra.mxu0 0
        %492 = vmatprep.subr.bf16.mxu0 0
        %493 = vmatpush1.bf16.msra.mxu0 0
        %494 = vmatprep.subr.bf16.mxu0 0
        %495 = vmatpush1.bf16.msra.mxu0 0
        %496 = vmatprep.mubr.bf16.mxu0 0
        %497 = vmatmul.mubr.bf16.gmra.mrb[0].mxu0 %v389
        %v498 = vpop.f32.mrb[0].mxu0
        %v499 = vadd.f32 %v414, %v498
        %v500 = vpop.f32.mrb[0].mxu0
        %v501 = vpop.f32.mrb[0].mxu0
        %v502 = vadd.f32 %v414, %v501
        %v503 = vpop.f32.mrb[0].mxu0
        %504 = vmatprep.mubr.bf16.mxu0 0
        %505 = vmatmul.mubr.bf16.gmra.mrb[0].mxu0 %v390
        %v506 = vpop.f32.mrb[0].mxu0
        %v507 = vadd.f32 %v414, %v506
        %v508 = vpop.f32.mrb[0].mxu0
        %v509 = vpop.f32.mrb[0].mxu0
        %v510 = vadd.f32 %v414, %v509
        %v511 = vpop.f32.mrb[0].mxu0
        %512 = vmatprep.mubr.bf16.mxu0 0
        %513 = vmatmul.mubr.bf16.gmra.mrb[0].mxu0 %v391
        %v514 = vpop.f32.mrb[0].mxu0
        %v515 = vadd.f32 %v414, %v514
        %v516 = vpop.f32.mrb[0].mxu0
        %v517 = vpop.f32.mrb[0].mxu0
        %v518 = vadd.f32 %v414, %v517
        %v519 = vpop.f32.mrb[0].mxu0
        %520 = vmatprep.mubr.bf16.mxu0 0
        %521 = vmatmul.mubr.bf16.gmra.mrb[0].mxu0 %v392
        %v522 = vpop.f32.mrb[0].mxu0
        %v523 = vadd.f32 %v414, %v522
        %v524 = vpop.f32.mrb[0].mxu0
        %v525 = vpop.f32.mrb[0].mxu0
        %v526 = vadd.f32 %v414, %v525
        %v527 = vpop.f32.mrb[0].mxu0
        %528 = vdwg.mxu0
        %vm529 = vcmp.ge.f32.partialorder %v499, 0.0
        %vm530 = vcmp.ge.f32.partialorder %v502, 0.0
        %vm531 = vcmp.ge.f32.partialorder %v507, 0.0
        %vm532 = vcmp.ge.f32.partialorder %v510, 0.0
        %vm533 = vcmp.ge.f32.partialorder %v515, 0.0
        %vm534 = vcmp.ge.f32.partialorder %v518, 0.0
        %vm535 = vcmp.ge.f32.partialorder %v523, 0.0
        %vm536 = vcmp.ge.f32.partialorder %v526, 0.0
        %v537 = vmul.f32 %v499, 0.1
        %v538 = vmul.f32 %v502, 0.1
        %v539 = vmul.f32 %v507, 0.1
        %v540 = vmul.f32 %v510, 0.1
        %v541 = vmul.f32 %v515, 0.1
        %v542 = vmul.f32 %v518, 0.1
        %v543 = vmul.f32 %v523, 0.1
        %v544 = vmul.f32 %v526, 0.1
        %v545 = vsel %vm529, %v499, %v537
        %v546 = vsel %vm530, %v502, %v538
        %v547 = vsel %vm531, %v507, %v539
        %v548 = vsel %vm532, %v510, %v540
        %v549 = vsel %vm533, %v515, %v541
        %v550 = vsel %vm534, %v518, %v542
        %v551 = vsel %vm535, %v523, %v543
        %v552 = vsel %vm536, %v526, %v544
        %s553 = scalar_lea.vmem [#allocation3], 16
        %vm554 = vcmask 261120
        %555 = vst.msk [vmem:[%s553] sm:$0xff] %vm554, %v545
        %556 = vst.msk [vmem:[%s553 + $0x8] sm:$0xff] %vm554, %v546
        %557 = vst.msk [vmem:[%s553 + $0x10] sm:$0xff] %vm554, %v547
        %558 = vst.msk [vmem:[%s553 + $0x18] sm:$0xff] %vm554, %v548
        %559 = vst.msk [vmem:[%s553 + $0x20] sm:$0xff] %vm554, %v549
        %560 = vst.msk [vmem:[%s553 + $0x28] sm:$0xff] %vm554, %v550
        %561 = vst.msk [vmem:[%s553 + $0x30] sm:$0xff] %vm554, %v551
        %562 = vst.msk [vmem:[%s553 + $0x38] sm:$0xff] %vm554, %v552
        // Predicated region
        $region73: #{tpu_custom_call.1} parent=47 // pred_check
          %p563 = pneg %p339
        $region74: #{tpu_custom_call.1} parent=47 // pred_check_branch
          %565 = sbr.rel (%p563) target = $region76
        $region75: #{tpu_custom_call.1} parent=47 // pred_region
          %s566 = smul.u32 1, 16
          %s567 = smul.u32 %s566, 1
          %s568 = sshll.u32 %s567, 4
          %569 = dma.done [#allocation4], %s568
          %v570 = vld [vmem:[#allocation2] sm:$0xff]
          %v571 = vld [vmem:[#allocation2 + $0x8] sm:$0xff]
          %v572 = vpack.c.bf16 %v571, %v570
          %v573 = vld [vmem:[%s2] sm:$0xf]
          %v574 = vld [vmem:[%s2 + $0x4] sm:$0xf]
          %v575 = vld [vmem:[%s2 + $0x8] sm:$0xf]
          %v576 = vld [vmem:[%s2 + $0xc] sm:$0xf]
          %v577 = vld [vmem:[%s2 + $0x10] sm:$0xf]
          %v578 = vld [vmem:[%s2 + $0x14] sm:$0xf]
          %v579 = vld [vmem:[%s2 + $0x18] sm:$0xf]
          %v580 = vld [vmem:[%s2 + $0x1c] sm:$0xf]
          %v581 = vld [vmem:[%s2 + $0x20] sm:$0xf]
          %v582 = vld [vmem:[%s2 + $0x24] sm:$0xf]
          %v583 = vld [vmem:[%s2 + $0x28] sm:$0xf]
          %v584 = vld [vmem:[%s2 + $0x2c] sm:$0xf]
          %v585 = vld [vmem:[%s2 + $0x30] sm:$0xf]
          %v586 = vld [vmem:[%s2 + $0x34] sm:$0xf]
          %v587 = vld [vmem:[%s2 + $0x38] sm:$0xf]
          %v588 = vld [vmem:[%s2 + $0x3c] sm:$0xf]
          %v589 = vld [vmem:[%s3] sm:$0x1]
          %v591 = vlaneseq
          %v592 = vshrl.u32 %v591, 7
          %v593 = vsub.s32 0, %v592
          %v594 = vrot.slane %v589, %v593
          %v612 = vunpack.c.l.b16 %v573
          %v613 = vunpack.c.l.b16 %v574
          %v614 = vunpack.c.l.b16 %v575
          %v615 = vunpack.c.l.b16 %v576
          %v616 = vunpack.c.l.b16 %v577
          %v617 = vunpack.c.l.b16 %v578
          %v618 = vunpack.c.l.b16 %v579
          %v619 = vunpack.c.l.b16 %v580
          %v620 = vunpack.c.l.b16 %v581
          %v621 = vunpack.c.l.b16 %v582
          %v622 = vunpack.c.l.b16 %v583
          %v623 = vunpack.c.l.b16 %v584
          %v624 = vunpack.c.l.b16 %v585
          %v625 = vunpack.c.l.b16 %v586
          %v626 = vunpack.c.l.b16 %v587
          %v627 = vunpack.c.l.b16 %v588
          %v628 = vpack.c.b16 %v613, %v612
          %v629 = vpack.c.b16 %v615, %v614
          %v630 = vpack.c.b16 %v617, %v616
          %v631 = vpack.c.b16 %v619, %v618
          %v632 = vpack.c.b16 %v621, %v620
          %v633 = vpack.c.b16 %v623, %v622
          %v634 = vpack.c.b16 %v625, %v624
          %v635 = vpack.c.b16 %v627, %v626
          %644 = vmatprep.subr.bf16.mxu0 0
          %645 = vmatpush1.bf16.msra.mxu0 %v628
          %646 = vmatprep.subr.bf16.mxu0 0
          %647 = vmatpush1.bf16.msra.mxu0 %v629
          %648 = vmatprep.subr.bf16.mxu0 0
          %649 = vmatpush1.bf16.msra.mxu0 %v630
          %650 = vmatprep.subr.bf16.mxu0 0
          %651 = vmatpush1.bf16.msra.mxu0 %v631
          %652 = vmatprep.subr.bf16.mxu0 0
          %653 = vmatpush1.bf16.msra.mxu0 %v632
          %654 = vmatprep.subr.bf16.mxu0 0
          %655 = vmatpush1.bf16.msra.mxu0 %v633
          %656 = vmatprep.subr.bf16.mxu0 0
          %657 = vmatpush1.bf16.msra.mxu0 %v634
          %658 = vmatprep.subr.bf16.mxu0 0
          %659 = vmatpush1.bf16.msra.mxu0 %v635
          %660 = vmatprep.subr.bf16.mxu0 0
          %661 = vmatpush1.bf16.msra.mxu0 0
          %662 = vmatprep.subr.bf16.mxu0 0
          %663 = vmatpush1.bf16.msra.mxu0 0
          %664 = vmatprep.subr.bf16.mxu0 0
          %665 = vmatpush1.bf16.msra.mxu0 0
          %666 = vmatprep.subr.bf16.mxu0 0
          %667 = vmatpush1.bf16.msra.mxu0 0
          %668 = vmatprep.subr.bf16.mxu0 0
          %669 = vmatpush1.bf16.msra.mxu0 0
          %670 = vmatprep.subr.bf16.mxu0 0
          %671 = vmatpush1.bf16.msra.mxu0 0
          %672 = vmatprep.subr.bf16.mxu0 0
          %673 = vmatpush1.bf16.msra.mxu0 0
          %674 = vmatprep.subr.bf16.mxu0 0
          %675 = vmatpush1.bf16.msra.mxu0 0
          %676 = vmatprep.mubr.bf16.mxu0 0
          %677 = vmatmul.mubr.bf16.gmra.mrb[0].mxu0 %v572
          %v678 = vpop.f32.mrb[0].mxu0
          %v679 = vadd.f32 %v594, %v678
          %v680 = vpop.f32.mrb[0].mxu0
          %v681 = vpop.f32.mrb[0].mxu0
          %v682 = vadd.f32 %v594, %v681
          %v683 = vpop.f32.mrb[0].mxu0
          %684 = vdwg.mxu0
          %vm685 = vcmp.ge.f32.partialorder %v679, 0.0
          %vm686 = vcmp.ge.f32.partialorder %v682, 0.0
          %v687 = vmul.f32 %v679, 0.1
          %v688 = vmul.f32 %v682, 0.1
          %v689 = vsel %vm685, %v679, %v687
          %v690 = vsel %vm686, %v682, %v688
          %691 = vst.msk [vmem:[#allocation3] sm:$0xff] %vm554, %v689
          %692 = vst.msk [vmem:[#allocation3 + $0x8] sm:$0xff] %vm554, %v690
        $region76: #{tpu_custom_call.1} parent=47 // pred_fallthru
          _
        %p693 = scmp.eq.s32.totalorder %s31, 0
        // Predicated region
        $region77: #{tpu_custom_call.1} parent=47 // pred_check
          %p694 = pneg %p693
        $region78: #{tpu_custom_call.1} parent=47 // pred_check_branch
          %696 = sbr.rel (%p694) target = $region80
        $region79: #{tpu_custom_call.1} parent=47 // pred_region
          %697 = vst.msk [vmem:[#allocation3] sm:$0xff] %vm554, 0.0
          %698 = vst.msk [vmem:[#allocation3 + $0x8] sm:$0xff] %vm554, 0.0
        $region80: #{tpu_custom_call.1} parent=47 // pred_fallthru
          _
        // Predicated region
        $region81: #{tpu_custom_call.1} parent=47 // pred_check
          %p699 = pneg %p340
        $region82: #{tpu_custom_call.1} parent=47 // pred_check_branch
          %701 = sbr.rel (%p699) target = $region84
        $region83: #{tpu_custom_call.1} parent=47 // pred_region
          %s702 = scalar_lea.vmem [#allocation2], 16
          %s703 = scalar_lea.sflag [#allocation4], 1
          %s704 = smul.u32 1, 16
          %s705 = smul.u32 %s704, 1
          %s706 = sshll.u32 %s705, 4
          %707 = dma.done %s703, %s706
          %v708 = vld [vmem:[%s702] sm:$0xff]
          %v709 = vld [vmem:[%s702 + $0x8] sm:$0xff]
          %v710 = vpack.c.bf16 %v709, %v708
          %v711 = vld [vmem:[%s2] sm:$0xf]
          %v712 = vld [vmem:[%s2 + $0x4] sm:$0xf]
          %v713 = vld [vmem:[%s2 + $0x8] sm:$0xf]
          %v714 = vld [vmem:[%s2 + $0xc] sm:$0xf]
          %v715 = vld [vmem:[%s2 + $0x10] sm:$0xf]
          %v716 = vld [vmem:[%s2 + $0x14] sm:$0xf]
          %v717 = vld [vmem:[%s2 + $0x18] sm:$0xf]
          %v718 = vld [vmem:[%s2 + $0x1c] sm:$0xf]
          %v719 = vld [vmem:[%s2 + $0x20] sm:$0xf]
          %v720 = vld [vmem:[%s2 + $0x24] sm:$0xf]
          %v721 = vld [vmem:[%s2 + $0x28] sm:$0xf]
          %v722 = vld [vmem:[%s2 + $0x2c] sm:$0xf]
          %v723 = vld [vmem:[%s2 + $0x30] sm:$0xf]
          %v724 = vld [vmem:[%s2 + $0x34] sm:$0xf]
          %v725 = vld [vmem:[%s2 + $0x38] sm:$0xf]
          %v726 = vld [vmem:[%s2 + $0x3c] sm:$0xf]
          %v727 = vld [vmem:[%s3] sm:$0x1]
          %v729 = vlaneseq
          %v730 = vshrl.u32 %v729, 7
          %v731 = vsub.s32 0, %v730
          %v732 = vrot.slane %v727, %v731
          %v750 = vunpack.c.l.b16 %v711
          %v751 = vunpack.c.l.b16 %v712
          %v752 = vunpack.c.l.b16 %v713
          %v753 = vunpack.c.l.b16 %v714
          %v754 = vunpack.c.l.b16 %v715
          %v755 = vunpack.c.l.b16 %v716
          %v756 = vunpack.c.l.b16 %v717
          %v757 = vunpack.c.l.b16 %v718
          %v758 = vunpack.c.l.b16 %v719
          %v759 = vunpack.c.l.b16 %v720
          %v760 = vunpack.c.l.b16 %v721
          %v761 = vunpack.c.l.b16 %v722
          %v762 = vunpack.c.l.b16 %v723
          %v763 = vunpack.c.l.b16 %v724
          %v764 = vunpack.c.l.b16 %v725
          %v765 = vunpack.c.l.b16 %v726
          %v766 = vpack.c.b16 %v751, %v750
          %v767 = vpack.c.b16 %v753, %v752
          %v768 = vpack.c.b16 %v755, %v754
          %v769 = vpack.c.b16 %v757, %v756
          %v770 = vpack.c.b16 %v759, %v758
          %v771 = vpack.c.b16 %v761, %v760
          %v772 = vpack.c.b16 %v763, %v762
          %v773 = vpack.c.b16 %v765, %v764
          %782 = vmatprep.subr.bf16.mxu0 0
          %783 = vmatpush1.bf16.msra.mxu0 %v766
          %784 = vmatprep.subr.bf16.mxu0 0
          %785 = vmatpush1.bf16.msra.mxu0 %v767
          %786 = vmatprep.subr.bf16.mxu0 0
          %787 = vmatpush1.bf16.msra.mxu0 %v768
          %788 = vmatprep.subr.bf16.mxu0 0
          %789 = vmatpush1.bf16.msra.mxu0 %v769
          %790 = vmatprep.subr.bf16.mxu0 0
          %791 = vmatpush1.bf16.msra.mxu0 %v770
          %792 = vmatprep.subr.bf16.mxu0 0
          %793 = vmatpush1.bf16.msra.mxu0 %v771
          %794 = vmatprep.subr.bf16.mxu0 0
          %795 = vmatpush1.bf16.msra.mxu0 %v772
          %796 = vmatprep.subr.bf16.mxu0 0
          %797 = vmatpush1.bf16.msra.mxu0 %v773
          %798 = vmatprep.subr.bf16.mxu0 0
          %799 = vmatpush1.bf16.msra.mxu0 0
          %800 = vmatprep.subr.bf16.mxu0 0
          %801 = vmatpush1.bf16.msra.mxu0 0
          %802 = vmatprep.subr.bf16.mxu0 0
          %803 = vmatpush1.bf16.msra.mxu0 0
          %804 = vmatprep.subr.bf16.mxu0 0
          %805 = vmatpush1.bf16.msra.mxu0 0
          %806 = vmatprep.subr.bf16.mxu0 0
          %807 = vmatpush1.bf16.msra.mxu0 0
          %808 = vmatprep.subr.bf16.mxu0 0
          %809 = vmatpush1.bf16.msra.mxu0 0
          %810 = vmatprep.subr.bf16.mxu0 0
          %811 = vmatpush1.bf16.msra.mxu0 0
          %812 = vmatprep.subr.bf16.mxu0 0
          %813 = vmatpush1.bf16.msra.mxu0 0
          %814 = vmatprep.mubr.bf16.mxu0 0
          %815 = vmatmul.mubr.bf16.gmra.mrb[0].mxu0 %v710
          %v816 = vpop.f32.mrb[0].mxu0
          %v817 = vadd.f32 %v732, %v816
          %v818 = vpop.f32.mrb[0].mxu0
          %v819 = vpop.f32.mrb[0].mxu0
          %v820 = vadd.f32 %v732, %v819
          %v821 = vpop.f32.mrb[0].mxu0
          %822 = vdwg.mxu0
          %vm823 = vcmp.ge.f32.partialorder %v817, 0.0
          %vm824 = vcmp.ge.f32.partialorder %v820, 0.0
          %v825 = vmul.f32 %v817, 0.1
          %v826 = vmul.f32 %v820, 0.1
          %v827 = vsel %vm823, %v817, %v825
          %v828 = vsel %vm824, %v820, %v826
          %s829 = scalar_lea.vmem [#allocation3], 80
          %830 = vst.msk [vmem:[%s829] sm:$0xff] %vm554, %v827
          %831 = vst.msk [vmem:[%s829 + $0x8] sm:$0xff] %vm554, %v828
        $region84: #{tpu_custom_call.1} parent=47 // pred_fallthru
          _
        %p832 = scmp.eq.s32.totalorder %s31, 3
        // Predicated region
        $region85: #{tpu_custom_call.1} parent=47 // pred_check
          %p833 = pneg %p832
        $region86: #{tpu_custom_call.1} parent=47 // pred_check_branch
          %835 = sbr.rel (%p833) target = $region88
        $region87: #{tpu_custom_call.1} parent=47 // pred_region
          %s836 = scalar_lea.vmem [#allocation3], 80
          %837 = vst.msk [vmem:[%s836] sm:$0xff] %vm554, 0.0
          %838 = vst.msk [vmem:[%s836 + $0x8] sm:$0xff] %vm554, 0.0
        $region88: #{tpu_custom_call.1} parent=47 // pred_fallthru
          _
        %v839 = vld [vmem:[#allocation3] sm:$0xff]
        %v840 = vld [vmem:[#allocation3 + $0x8] sm:$0xff]
        %v841 = vld [vmem:[#allocation3 + $0x10] sm:$0xff]
        %v842 = vld [vmem:[#allocation3 + $0x18] sm:$0xff]
        %v843 = vld [vmem:[#allocation3 + $0x20] sm:$0xff]
        %v844 = vld [vmem:[#allocation3 + $0x28] sm:$0xff]
        %v845 = vld [vmem:[#allocation3 + $0x30] sm:$0xff]
        %v846 = vld [vmem:[#allocation3 + $0x38] sm:$0xff]
        %v847 = vld [vmem:[#allocation3 + $0x40] sm:$0xff]
        %v848 = vld [vmem:[#allocation3 + $0x48] sm:$0xff]
        %v849 = vld [vmem:[#allocation3 + $0x50] sm:$0xff]
        %v850 = vld [vmem:[#allocation3 + $0x58] sm:$0xff]
        %v851 = vlaneseq
        %v852 = vshrl.u32 %v851, 7
        %v853 = vadd.s32 %v852, 8
        %v854 = vadd.s32 %v852, 16
        %v855 = vadd.s32 %v852, 24
        %v856 = vadd.s32 %v852, 32
        %v857 = vadd.s32 %v852, 40
        %v858 = vadd.s32 %v852, 48
        %v859 = vadd.s32 %v852, 56
        %v860 = vadd.s32 %v852, 64
        %v861 = vadd.s32 %v852, 72
        %v862 = vadd.s32 %v852, 80
        %v863 = vadd.s32 %v852, 88
        %vm864 = vcmp.lt.s32.totalorder %v852, 0
        %v865 = vsub.s32 0, %v852
        %v866 = vsel %vm864, %v865, %v852
        %v867 = vshrl.u32 %v866, 4
        %v868 = vand.u32 %v866, 15
        %v869 = vsub.s32 0, %v868
        %v870 = vsel %vm864, %v869, %v868
        %vm871 = vcmp.lt.s32.totalorder %v853, 0
        %v872 = vsub.s32 0, %v853
        %v873 = vsel %vm871, %v872, %v853
        %v874 = vshrl.u32 %v873, 4
        %v875 = vand.u32 %v873, 15
        %v876 = vsub.s32 0, %v875
        %v877 = vsel %vm871, %v876, %v875
        %vm878 = vcmp.lt.s32.totalorder %v854, 0
        %v879 = vsub.s32 0, %v854
        %v880 = vsel %vm878, %v879, %v854
        %v881 = vshrl.u32 %v880, 4
        %v882 = vand.u32 %v880, 15
        %v883 = vsub.s32 0, %v882
        %v884 = vsel %vm878, %v883, %v882
        %vm885 = vcmp.lt.s32.totalorder %v855, 0
        %v886 = vsub.s32 0, %v855
        %v887 = vsel %vm885, %v886, %v855
        %v888 = vshrl.u32 %v887, 4
        %v889 = vand.u32 %v887, 15
        %v890 = vsub.s32 0, %v889
        %v891 = vsel %vm885, %v890, %v889
        %vm892 = vcmp.lt.s32.totalorder %v856, 0
        %v893 = vsub.s32 0, %v856
        %v894 = vsel %vm892, %v893, %v856
        %v895 = vshrl.u32 %v894, 4
        %v896 = vand.u32 %v894, 15
        %v897 = vsub.s32 0, %v896
        %v898 = vsel %vm892, %v897, %v896
        %vm899 = vcmp.lt.s32.totalorder %v857, 0
        %v900 = vsub.s32 0, %v857
        %v901 = vsel %vm899, %v900, %v857
        %v902 = vshrl.u32 %v901, 4
        %v903 = vand.u32 %v901, 15
        %v904 = vsub.s32 0, %v903
        %v905 = vsel %vm899, %v904, %v903
        %vm906 = vcmp.lt.s32.totalorder %v858, 0
        %v907 = vsub.s32 0, %v858
        %v908 = vsel %vm906, %v907, %v858
        %v909 = vshrl.u32 %v908, 4
        %v910 = vand.u32 %v908, 15
        %v911 = vsub.s32 0, %v910
        %v912 = vsel %vm906, %v911, %v910
        %vm913 = vcmp.lt.s32.totalorder %v859, 0
        %v914 = vsub.s32 0, %v859
        %v915 = vsel %vm913, %v914, %v859
        %v916 = vshrl.u32 %v915, 4
        %v917 = vand.u32 %v915, 15
        %v918 = vsub.s32 0, %v917
        %v919 = vsel %vm913, %v918, %v917
        %vm920 = vcmp.lt.s32.totalorder %v860, 0
        %v921 = vsub.s32 0, %v860
        %v922 = vsel %vm920, %v921, %v860
        %v923 = vshrl.u32 %v922, 4
        %v924 = vand.u32 %v922, 15
        %v925 = vsub.s32 0, %v924
        %v926 = vsel %vm920, %v925, %v924
        %vm927 = vcmp.lt.s32.totalorder %v861, 0
        %v928 = vsub.s32 0, %v861
        %v929 = vsel %vm927, %v928, %v861
        %v930 = vshrl.u32 %v929, 4
        %v931 = vand.u32 %v929, 15
        %v932 = vsub.s32 0, %v931
        %v933 = vsel %vm927, %v932, %v931
        %vm934 = vcmp.lt.s32.totalorder %v862, 0
        %v935 = vsub.s32 0, %v862
        %v936 = vsel %vm934, %v935, %v862
        %v937 = vshrl.u32 %v936, 4
        %v938 = vand.u32 %v936, 15
        %v939 = vsub.s32 0, %v938
        %v940 = vsel %vm934, %v939, %v938
        %vm941 = vcmp.lt.s32.totalorder %v863, 0
        %v942 = vsub.s32 0, %v863
        %v943 = vsel %vm941, %v942, %v863
        %v944 = vshrl.u32 %v943, 4
        %v945 = vand.u32 %v943, 15
        %v946 = vsub.s32 0, %v945
        %v947 = vsel %vm941, %v946, %v945
        %vm948 = vcmp.ne.s32.totalorder %v870, 0
        %vm949 = vcmp.ne.s32.totalorder %v877, 0
        %vm950 = vcmp.ne.s32.totalorder %v884, 0
        %vm951 = vcmp.ne.s32.totalorder %v891, 0
        %vm952 = vcmp.ne.s32.totalorder %v898, 0
        %vm953 = vcmp.ne.s32.totalorder %v905, 0
        %vm954 = vcmp.ne.s32.totalorder %v912, 0
        %vm955 = vcmp.ne.s32.totalorder %v919, 0
        %vm956 = vcmp.ne.s32.totalorder %v926, 0
        %vm957 = vcmp.ne.s32.totalorder %v933, 0
        %vm958 = vcmp.ne.s32.totalorder %v940, 0
        %vm959 = vcmp.ne.s32.totalorder %v947, 0
        %vm960 = vcmp.lt.s32.totalorder %v870, 0
        %vm961 = vcmp.lt.s32.totalorder %v877, 0
        %vm962 = vcmp.lt.s32.totalorder %v884, 0
        %vm963 = vcmp.lt.s32.totalorder %v891, 0
        %vm964 = vcmp.lt.s32.totalorder %v898, 0
        %vm965 = vcmp.lt.s32.totalorder %v905, 0
        %vm966 = vcmp.lt.s32.totalorder %v912, 0
        %vm967 = vcmp.lt.s32.totalorder %v919, 0
        %vm968 = vcmp.lt.s32.totalorder %v926, 0
        %vm969 = vcmp.lt.s32.totalorder %v933, 0
        %vm970 = vcmp.lt.s32.totalorder %v940, 0
        %vm971 = vcmp.lt.s32.totalorder %v947, 0
        %vm972 = vmand %vm960, %vm948
        %vm973 = vmand %vm961, %vm949
        %vm974 = vmand %vm962, %vm950
        %vm975 = vmand %vm963, %vm951
        %vm976 = vmand %vm964, %vm952
        %vm977 = vmand %vm965, %vm953
        %vm978 = vmand %vm966, %vm954
        %vm979 = vmand %vm967, %vm955
        %vm980 = vmand %vm968, %vm956
        %vm981 = vmand %vm969, %vm957
        %vm982 = vmand %vm970, %vm958
        %vm983 = vmand %vm971, %vm959
        %v984 = vadd.s32 %v870, 16
        %v985 = vadd.s32 %v877, 16
        %v986 = vadd.s32 %v884, 16
        %v987 = vadd.s32 %v891, 16
        %v988 = vadd.s32 %v898, 16
        %v989 = vadd.s32 %v905, 16
        %v990 = vadd.s32 %v912, 16
        %v991 = vadd.s32 %v919, 16
        %v992 = vadd.s32 %v926, 16
        %v993 = vadd.s32 %v933, 16
        %v994 = vadd.s32 %v940, 16
        %v995 = vadd.s32 %v947, 16
        %v996 = vsel %vm972, %v984, %v870
        %v997 = vsel %vm973, %v985, %v877
        %v998 = vsel %vm974, %v986, %v884
        %v999 = vsel %vm975, %v987, %v891
        %v1000 = vsel %vm976, %v988, %v898
        %v1001 = vsel %vm977, %v989, %v905
        %v1002 = vsel %vm978, %v990, %v912
        %v1003 = vsel %vm979, %v991, %v919
        %v1004 = vsel %vm980, %v992, %v926
        %v1005 = vsel %vm981, %v993, %v933
        %v1006 = vsel %vm982, %v994, %v940
        %v1007 = vsel %vm983, %v995, %v947
        %vm1008 = vcmp.ne.s32.totalorder %v996, 0
        %vm1009 = vcmp.ne.s32.totalorder %v997, 0
        %vm1010 = vcmp.ne.s32.totalorder %v998, 0
        %vm1011 = vcmp.ne.s32.totalorder %v999, 0
        %vm1012 = vcmp.ne.s32.totalorder %v1000, 0
        %vm1013 = vcmp.ne.s32.totalorder %v1001, 0
        %vm1014 = vcmp.ne.s32.totalorder %v1002, 0
        %vm1015 = vcmp.ne.s32.totalorder %v1003, 0
        %vm1016 = vcmp.ne.s32.totalorder %v1004, 0
        %vm1017 = vcmp.ne.s32.totalorder %v1005, 0
        %vm1018 = vcmp.ne.s32.totalorder %v1006, 0
        %vm1019 = vcmp.ne.s32.totalorder %v1007, 0
        %v1020 = vrot.slane %v839, 7
        %v1021 = vrot.slane %v840, 7
        %v1022 = vrot.slane %v841, 7
        %v1023 = vrot.slane %v842, 7
        %v1024 = vrot.slane %v843, 7
        %v1025 = vrot.slane %v844, 7
        %v1026 = vrot.slane %v845, 7
        %v1027 = vrot.slane %v846, 7
        %v1028 = vrot.slane %v847, 7
        %v1029 = vrot.slane %v848, 7
        %v1030 = vrot.slane %v849, 7
        %v1031 = vrot.slane %v850, 7
        %vm1032 = vcmp.lt.s32.totalorder %v852, 1
        %v1033 = vsel %vm1032, %v1030, %v1031
        %v1034 = vsel %vm1032, %v1029, %v1030
        %v1035 = vsel %vm1032, %v1028, %v1029
        %v1036 = vsel %vm1032, %v1027, %v1028
        %v1037 = vsel %vm1032, %v1026, %v1027
        %v1038 = vsel %vm1032, %v1025, %v1026
        %v1039 = vsel %vm1032, %v1024, %v1025
        %v1040 = vsel %vm1032, %v1023, %v1024
        %v1041 = vsel %vm1032, %v1022, %v1023
        %v1042 = vsel %vm1032, %v1021, %v1022
        %v1043 = vsel %vm1032, %v1020, %v1021
        %v1044 = vsel %vm1032, %v1031, %v1020
        %v1045 = vsel %vm1008, 1, 0
        %v1046 = vsel %vm1009, 1, 0
        %v1047 = vsel %vm1010, 1, 0
        %v1048 = vsel %vm1011, 1, 0
        %v1049 = vsel %vm1012, 1, 0
        %v1050 = vsel %vm1013, 1, 0
        %v1051 = vsel %vm1014, 1, 0
        %v1052 = vsel %vm1015, 1, 0
        %v1053 = vsel %vm1016, 1, 0
        %v1054 = vsel %vm1017, 1, 0
        %v1055 = vsel %vm1018, 1, 0
        %v1056 = vsel %vm1019, 1, 0
        %vm1057 = vcmp.eq.s32.totalorder %v1045, 1
        %vm1058 = vcmp.eq.s32.totalorder %v1046, 1
        %vm1059 = vcmp.eq.s32.totalorder %v1047, 1
        %vm1060 = vcmp.eq.s32.totalorder %v1048, 1
        %vm1061 = vcmp.eq.s32.totalorder %v1049, 1
        %vm1062 = vcmp.eq.s32.totalorder %v1050, 1
        %vm1063 = vcmp.eq.s32.totalorder %v1051, 1
        %vm1064 = vcmp.eq.s32.totalorder %v1052, 1
        %vm1065 = vcmp.eq.s32.totalorder %v1053, 1
        %vm1066 = vcmp.eq.s32.totalorder %v1054, 1
        %vm1067 = vcmp.eq.s32.totalorder %v1055, 1
        %vm1068 = vcmp.eq.s32.totalorder %v1056, 1
        %v1069 = vsel %vm1057, %v1044, 0.0
        %v1070 = vsel %vm1058, %v1043, 0.0
        %v1071 = vsel %vm1059, %v1042, 0.0
        %v1072 = vsel %vm1060, %v1041, 0.0
        %v1073 = vsel %vm1061, %v1040, 0.0
        %v1074 = vsel %vm1062, %v1039, 0.0
        %v1075 = vsel %vm1063, %v1038, 0.0
        %v1076 = vsel %vm1064, %v1037, 0.0
        %v1077 = vsel %vm1065, %v1036, 0.0
        %v1078 = vsel %vm1066, %v1035, 0.0
        %v1079 = vsel %vm1067, %v1034, 0.0
        %v1080 = vsel %vm1068, %v1033, 0.0
        %vm1081 = vcmp.ne.s32.totalorder %v996, 15
        %vm1082 = vcmp.ne.s32.totalorder %v997, 15
        %vm1083 = vcmp.ne.s32.totalorder %v998, 15
        %vm1084 = vcmp.ne.s32.totalorder %v999, 15
        %vm1085 = vcmp.ne.s32.totalorder %v1000, 15
        %vm1086 = vcmp.ne.s32.totalorder %v1001, 15
        %vm1087 = vcmp.ne.s32.totalorder %v1002, 15
        %vm1088 = vcmp.ne.s32.totalorder %v1003, 15
        %vm1089 = vcmp.ne.s32.totalorder %v1004, 15
        %vm1090 = vcmp.ne.s32.totalorder %v1005, 15
        %vm1091 = vcmp.ne.s32.totalorder %v1006, 15
        %vm1092 = vcmp.ne.s32.totalorder %v1007, 15
        %v1093 = vrot.slane %v839, 1
        %v1094 = vrot.slane %v840, 1
        %v1095 = vrot.slane %v841, 1
        %v1096 = vrot.slane %v842, 1
        %v1097 = vrot.slane %v843, 1
        %v1098 = vrot.slane %v844, 1
        %v1099 = vrot.slane %v845, 1
        %v1100 = vrot.slane %v846, 1
        %v1101 = vrot.slane %v847, 1
        %v1102 = vrot.slane %v848, 1
        %v1103 = vrot.slane %v849, 1
        %v1104 = vrot.slane %v850, 1
        %vm1105 = vcmp.lt.s32.totalorder %v852, 7
        %v1106 = vsel %vm1105, %v1103, %v1104
        %v1107 = vsel %vm1105, %v1102, %v1103
        %v1108 = vsel %vm1105, %v1101, %v1102
        %v1109 = vsel %vm1105, %v1100, %v1101
        %v1110 = vsel %vm1105, %v1099, %v1100
        %v1111 = vsel %vm1105, %v1098, %v1099
        %v1112 = vsel %vm1105, %v1097, %v1098
        %v1113 = vsel %vm1105, %v1096, %v1097
        %v1114 = vsel %vm1105, %v1095, %v1096
        %v1115 = vsel %vm1105, %v1094, %v1095
        %v1116 = vsel %vm1105, %v1093, %v1094
        %v1117 = vsel %vm1105, %v1104, %v1093
        %v1118 = vsel %vm1081, 1, 0
        %v1119 = vsel %vm1082, 1, 0
        %v1120 = vsel %vm1083, 1, 0
        %v1121 = vsel %vm1084, 1, 0
        %v1122 = vsel %vm1085, 1, 0
        %v1123 = vsel %vm1086, 1, 0
        %v1124 = vsel %vm1087, 1, 0
        %v1125 = vsel %vm1088, 1, 0
        %v1126 = vsel %vm1089, 1, 0
        %v1127 = vsel %vm1090, 1, 0
        %v1128 = vsel %vm1091, 1, 0
        %v1129 = vsel %vm1092, 1, 0
        %vm1130 = vcmp.eq.s32.totalorder %v1118, 1
        %vm1131 = vcmp.eq.s32.totalorder %v1119, 1
        %vm1132 = vcmp.eq.s32.totalorder %v1120, 1
        %vm1133 = vcmp.eq.s32.totalorder %v1121, 1
        %vm1134 = vcmp.eq.s32.totalorder %v1122, 1
        %vm1135 = vcmp.eq.s32.totalorder %v1123, 1
        %vm1136 = vcmp.eq.s32.totalorder %v1124, 1
        %vm1137 = vcmp.eq.s32.totalorder %v1125, 1
        %vm1138 = vcmp.eq.s32.totalorder %v1126, 1
        %vm1139 = vcmp.eq.s32.totalorder %v1127, 1
        %vm1140 = vcmp.eq.s32.totalorder %v1128, 1
        %vm1141 = vcmp.eq.s32.totalorder %v1129, 1
        %v1142 = vsel %vm1130, %v1116, 0.0
        %v1143 = vsel %vm1131, %v1115, 0.0
        %v1144 = vsel %vm1132, %v1114, 0.0
        %v1145 = vsel %vm1133, %v1113, 0.0
        %v1146 = vsel %vm1134, %v1112, 0.0
        %v1147 = vsel %vm1135, %v1111, 0.0
        %v1148 = vsel %vm1136, %v1110, 0.0
        %v1149 = vsel %vm1137, %v1109, 0.0
        %v1150 = vsel %vm1138, %v1108, 0.0
        %v1151 = vsel %vm1139, %v1107, 0.0
        %v1152 = vsel %vm1140, %v1106, 0.0
        %v1153 = vsel %vm1141, %v1117, 0.0
        %v1154 = vpack.c.bf16 %v1070, %v1069
        %v1155 = vpack.c.bf16 %v1072, %v1071
        %v1156 = vpack.c.bf16 %v1074, %v1073
        %v1157 = vpack.c.bf16 %v1076, %v1075
        %v1158 = vpack.c.bf16 %v1078, %v1077
        %v1159 = vpack.c.bf16 %v1080, %v1079
        %v1160 = vpack.c.bf16 %v840, %v839
        %v1161 = vpack.c.bf16 %v842, %v841
        %v1162 = vpack.c.bf16 %v844, %v843
        %v1163 = vpack.c.bf16 %v846, %v845
        %v1164 = vpack.c.bf16 %v848, %v847
        %v1165 = vpack.c.bf16 %v850, %v849
        %v1166 = vpack.c.bf16 %v1143, %v1142
        %v1167 = vpack.c.bf16 %v1145, %v1144
        %v1168 = vpack.c.bf16 %v1147, %v1146
        %v1169 = vpack.c.bf16 %v1149, %v1148
        %v1170 = vpack.c.bf16 %v1151, %v1150
        %v1171 = vpack.c.bf16 %v1153, %v1152
        %v1172 = vld [vmem:[#allocation8] sm:$0xf]
        %v1173 = vld [vmem:[#allocation8 + $0x4] sm:$0xf]
        %v1174 = vld [vmem:[#allocation8 + $0x8] sm:$0xf]
        %v1175 = vld [vmem:[#allocation8 + $0xc] sm:$0xf]
        %s1176 = scalar_lea.vmem [#allocation8], 16
        %v1177 = vld [vmem:[%s1176] sm:$0xf]
        %v1178 = vld [vmem:[%s1176 + $0x4] sm:$0xf]
        %v1179 = vld [vmem:[%s1176 + $0x8] sm:$0xf]
        %v1180 = vld [vmem:[%s1176 + $0xc] sm:$0xf]
        %v1185 = vunpack.c.l.b16 %v1177
        %v1186 = vunpack.c.l.b16 %v1178
        %v1187 = vunpack.c.l.b16 %v1179
        %v1188 = vunpack.c.l.b16 %v1180
        %v1189 = vpack.c.b16 %v1186, %v1185
        %v1190 = vpack.c.b16 %v1188, %v1187
        %v1194 = vsel %vm554, %v1160, 0
        %v1197 = vsel %vm554, %v1161, 0
        %v1200 = vsel %vm554, %v1162, 0
        %v1203 = vsel %vm554, %v1163, 0
        %1205 = vmatprep.subr.bf16.mxu0 0
        %1206 = vmatpush1.bf16.msra.mxu0 %v1189
        %1207 = vmatprep.subr.bf16.mxu0 0
        %1208 = vmatpush1.bf16.msra.mxu0 %v1190
        %1209 = vmatprep.subr.bf16.mxu0 0
        %1210 = vmatpush1.bf16.msra.mxu0 0
        %1211 = vmatprep.subr.bf16.mxu0 0
        %1212 = vmatpush1.bf16.msra.mxu0 0
        %1213 = vmatprep.subr.bf16.mxu0 0
        %1214 = vmatpush1.bf16.msra.mxu0 0
        %1215 = vmatprep.subr.bf16.mxu0 0
        %1216 = vmatpush1.bf16.msra.mxu0 0
        %1217 = vmatprep.subr.bf16.mxu0 0
        %1218 = vmatpush1.bf16.msra.mxu0 0
        %1219 = vmatprep.subr.bf16.mxu0 0
        %1220 = vmatpush1.bf16.msra.mxu0 0
        %1221 = vmatprep.subr.bf16.mxu0 0
        %1222 = vmatpush1.bf16.msra.mxu0 0
        %1223 = vmatprep.subr.bf16.mxu0 0
        %1224 = vmatpush1.bf16.msra.mxu0 0
        %1225 = vmatprep.subr.bf16.mxu0 0
        %1226 = vmatpush1.bf16.msra.mxu0 0
        %1227 = vmatprep.subr.bf16.mxu0 0
        %1228 = vmatpush1.bf16.msra.mxu0 0
        %1229 = vmatprep.subr.bf16.mxu0 0
        %1230 = vmatpush1.bf16.msra.mxu0 0
        %1231 = vmatprep.subr.bf16.mxu0 0
        %1232 = vmatpush1.bf16.msra.mxu0 0
        %1233 = vmatprep.subr.bf16.mxu0 0
        %1234 = vmatpush1.bf16.msra.mxu0 0
        %1235 = vmatprep.subr.bf16.mxu0 0
        %1236 = vmatpush1.bf16.msra.mxu0 0
        %1237 = vmatprep.mubr.bf16.mxu0 0
        %1238 = vmatmul.mubr.bf16.gmra.mrb[0].mxu0 %v1194
        %v1239 = vpop.f32.mrb[0].mxu0
        %v1240 = vadd.f32 0.0, %v1239
        %v1241 = vpop.f32.mrb[0].mxu0
        %v1242 = vpop.f32.mrb[0].mxu0
        %v1243 = vadd.f32 0.0, %v1242
        %v1244 = vpop.f32.mrb[0].mxu0
        %1245 = vmatprep.mubr.bf16.mxu0 0
        %1246 = vmatmul.mubr.bf16.gmra.mrb[0].mxu0 %v1197
        %v1247 = vpop.f32.mrb[0].mxu0
        %v1248 = vadd.f32 0.0, %v1247
        %v1249 = vpop.f32.mrb[0].mxu0
        %v1250 = vpop.f32.mrb[0].mxu0
        %v1251 = vadd.f32 0.0, %v1250
        %v1252 = vpop.f32.mrb[0].mxu0
        %1253 = vmatprep.mubr.bf16.mxu0 0
        %1254 = vmatmul.mubr.bf16.gmra.mrb[0].mxu0 %v1200
        %v1255 = vpop.f32.mrb[0].mxu0
        %v1256 = vadd.f32 0.0, %v1255
        %v1257 = vpop.f32.mrb[0].mxu0
        %v1258 = vpop.f32.mrb[0].mxu0
        %v1259 = vadd.f32 0.0, %v1258
        %v1260 = vpop.f32.mrb[0].mxu0
        %1261 = vmatprep.mubr.bf16.mxu0 0
        %1262 = vmatmul.mubr.bf16.gmra.mrb[0].mxu0 %v1203
        %v1263 = vpop.f32.mrb[0].mxu0
        %v1264 = vadd.f32 0.0, %v1263
        %v1265 = vpop.f32.mrb[0].mxu0
        %v1266 = vpop.f32.mrb[0].mxu0
        %v1267 = vadd.f32 0.0, %v1266
        %v1268 = vpop.f32.mrb[0].mxu0
        %1269 = vdwg.mxu0
        %v1274 = vunpack.c.l.b16 %v1172
        %v1275 = vunpack.c.l.b16 %v1173
        %v1276 = vunpack.c.l.b16 %v1174
        %v1277 = vunpack.c.l.b16 %v1175
        %v1278 = vpack.c.b16 %v1275, %v1274
        %v1279 = vpack.c.b16 %v1277, %v1276
        %v1283 = vsel %vm554, %v1154, 0
        %v1286 = vsel %vm554, %v1155, 0
        %v1289 = vsel %vm554, %v1156, 0
        %v1292 = vsel %vm554, %v1157, 0
        %1294 = vmatprep.subr.bf16.mxu0 0
        %1295 = vmatpush1.bf16.msra.mxu0 %v1278
        %1296 = vmatprep.subr.bf16.mxu0 0
        %1297 = vmatpush1.bf16.msra.mxu0 %v1279
        %1298 = vmatprep.subr.bf16.mxu0 0
        %1299 = vmatpush1.bf16.msra.mxu0 0
        %1300 = vmatprep.subr.bf16.mxu0 0
        %1301 = vmatpush1.bf16.msra.mxu0 0
        %1302 = vmatprep.subr.bf16.mxu0 0
        %1303 = vmatpush1.bf16.msra.mxu0 0
        %1304 = vmatprep.subr.bf16.mxu0 0
        %1305 = vmatpush1.bf16.msra.mxu0 0
        %1306 = vmatprep.subr.bf16.mxu0 0
        %1307 = vmatpush1.bf16.msra.mxu0 0
        %1308 = vmatprep.subr.bf16.mxu0 0
        %1309 = vmatpush1.bf16.msra.mxu0 0
        %1310 = vmatprep.subr.bf16.mxu0 0
        %1311 = vmatpush1.bf16.msra.mxu0 0
        %1312 = vmatprep.subr.bf16.mxu0 0
        %1313 = vmatpush1.bf16.msra.mxu0 0
        %1314 = vmatprep.subr.bf16.mxu0 0
        %1315 = vmatpush1.bf16.msra.mxu0 0
        %1316 = vmatprep.subr.bf16.mxu0 0
        %1317 = vmatpush1.bf16.msra.mxu0 0
        %1318 = vmatprep.subr.bf16.mxu0 0
        %1319 = vmatpush1.bf16.msra.mxu0 0
        %1320 = vmatprep.subr.bf16.mxu0 0
        %1321 = vmatpush1.bf16.msra.mxu0 0
        %1322 = vmatprep.subr.bf16.mxu0 0
        %1323 = vmatpush1.bf16.msra.mxu0 0
        %1324 = vmatprep.subr.bf16.mxu0 0
        %1325 = vmatpush1.bf16.msra.mxu0 0
        %1326 = vmatprep.mubr.bf16.mxu0 0
        %1327 = vmatmul.mubr.bf16.gmra.mrb[0].mxu0 %v1283
        %v1328 = vpop.f32.mrb[0].mxu0
        %v1329 = vadd.f32 %v1240, %v1328
        %v1330 = vpop.f32.mrb[0].mxu0
        %v1331 = vpop.f32.mrb[0].mxu0
        %v1332 = vadd.f32 %v1243, %v1331
        %v1333 = vpop.f32.mrb[0].mxu0
        %1334 = vmatprep.mubr.bf16.mxu0 0
        %1335 = vmatmul.mubr.bf16.gmra.mrb[0].mxu0 %v1286
        %v1336 = vpop.f32.mrb[0].mxu0
        %v1337 = vadd.f32 %v1248, %v1336
        %v1338 = vpop.f32.mrb[0].mxu0
        %v1339 = vpop.f32.mrb[0].mxu0
        %v1340 = vadd.f32 %v1251, %v1339
        %v1341 = vpop.f32.mrb[0].mxu0
        %1342 = vmatprep.mubr.bf16.mxu0 0
        %1343 = vmatmul.mubr.bf16.gmra.mrb[0].mxu0 %v1289
        %v1344 = vpop.f32.mrb[0].mxu0
        %v1345 = vadd.f32 %v1256, %v1344
        %v1346 = vpop.f32.mrb[0].mxu0
        %v1347 = vpop.f32.mrb[0].mxu0
        %v1348 = vadd.f32 %v1259, %v1347
        %v1349 = vpop.f32.mrb[0].mxu0
        %1350 = vmatprep.mubr.bf16.mxu0 0
        %1351 = vmatmul.mubr.bf16.gmra.mrb[0].mxu0 %v1292
        %v1352 = vpop.f32.mrb[0].mxu0
        %v1353 = vadd.f32 %v1264, %v1352
        %v1354 = vpop.f32.mrb[0].mxu0
        %v1355 = vpop.f32.mrb[0].mxu0
        %v1356 = vadd.f32 %v1267, %v1355
        %v1357 = vpop.f32.mrb[0].mxu0
        %1358 = vdwg.mxu0
        %s1359 = scalar_lea.vmem [#allocation8], 32
        %v1360 = vld [vmem:[%s1359] sm:$0xf]
        %v1361 = vld [vmem:[%s1359 + $0x4] sm:$0xf]
        %v1362 = vld [vmem:[%s1359 + $0x8] sm:$0xf]
        %v1363 = vld [vmem:[%s1359 + $0xc] sm:$0xf]
        %v1368 = vunpack.c.l.b16 %v1360
        %v1369 = vunpack.c.l.b16 %v1361
        %v1370 = vunpack.c.l.b16 %v1362
        %v1371 = vunpack.c.l.b16 %v1363
        %v1372 = vpack.c.b16 %v1369, %v1368
        %v1373 = vpack.c.b16 %v1371, %v1370
        %v1377 = vsel %vm554, %v1166, 0
        %v1380 = vsel %vm554, %v1167, 0
        %v1383 = vsel %vm554, %v1168, 0
        %v1386 = vsel %vm554, %v1169, 0
        %1388 = vmatprep.subr.bf16.mxu0 0
        %1389 = vmatpush1.bf16.msra.mxu0 %v1372
        %1390 = vmatprep.subr.bf16.mxu0 0
        %1391 = vmatpush1.bf16.msra.mxu0 %v1373
        %1392 = vmatprep.subr.bf16.mxu0 0
        %1393 = vmatpush1.bf16.msra.mxu0 0
        %1394 = vmatprep.subr.bf16.mxu0 0
        %1395 = vmatpush1.bf16.msra.mxu0 0
        %1396 = vmatprep.subr.bf16.mxu0 0
        %1397 = vmatpush1.bf16.msra.mxu0 0
        %1398 = vmatprep.subr.bf16.mxu0 0
        %1399 = vmatpush1.bf16.msra.mxu0 0
        %1400 = vmatprep.subr.bf16.mxu0 0
        %1401 = vmatpush1.bf16.msra.mxu0 0
        %1402 = vmatprep.subr.bf16.mxu0 0
        %1403 = vmatpush1.bf16.msra.mxu0 0
        %1404 = vmatprep.subr.bf16.mxu0 0
        %1405 = vmatpush1.bf16.msra.mxu0 0
        %1406 = vmatprep.subr.bf16.mxu0 0
        %1407 = vmatpush1.bf16.msra.mxu0 0
        %1408 = vmatprep.subr.bf16.mxu0 0
        %1409 = vmatpush1.bf16.msra.mxu0 0
        %1410 = vmatprep.subr.bf16.mxu0 0
        %1411 = vmatpush1.bf16.msra.mxu0 0
        %1412 = vmatprep.subr.bf16.mxu0 0
        %1413 = vmatpush1.bf16.msra.mxu0 0
        %1414 = vmatprep.subr.bf16.mxu0 0
        %1415 = vmatpush1.bf16.msra.mxu0 0
        %1416 = vmatprep.subr.bf16.mxu0 0
        %1417 = vmatpush1.bf16.msra.mxu0 0
        %1418 = vmatprep.subr.bf16.mxu0 0
        %1419 = vmatpush1.bf16.msra.mxu0 0
        %1420 = vmatprep.mubr.bf16.mxu0 0
        %1421 = vmatmul.mubr.bf16.gmra.mrb[0].mxu0 %v1377
        %v1422 = vpop.f32.mrb[0].mxu0
        %v1423 = vadd.f32 0.0, %v1422
        %v1424 = vpop.f32.mrb[0].mxu0
        %v1425 = vpop.f32.mrb[0].mxu0
        %v1426 = vadd.f32 0.0, %v1425
        %v1427 = vpop.f32.mrb[0].mxu0
        %1428 = vmatprep.mubr.bf16.mxu0 0
        %1429 = vmatmul.mubr.bf16.gmra.mrb[0].mxu0 %v1380
        %v1430 = vpop.f32.mrb[0].mxu0
        %v1431 = vadd.f32 0.0, %v1430
        %v1432 = vpop.f32.mrb[0].mxu0
        %v1433 = vpop.f32.mrb[0].mxu0
        %v1434 = vadd.f32 0.0, %v1433
        %v1435 = vpop.f32.mrb[0].mxu0
        %1436 = vmatprep.mubr.bf16.mxu0 0
        %1437 = vmatmul.mubr.bf16.gmra.mrb[0].mxu0 %v1383
        %v1438 = vpop.f32.mrb[0].mxu0
        %v1439 = vadd.f32 0.0, %v1438
        %v1440 = vpop.f32.mrb[0].mxu0
        %v1441 = vpop.f32.mrb[0].mxu0
        %v1442 = vadd.f32 0.0, %v1441
        %v1443 = vpop.f32.mrb[0].mxu0
        %1444 = vmatprep.mubr.bf16.mxu0 0
        %1445 = vmatmul.mubr.bf16.gmra.mrb[0].mxu0 %v1386
        %v1446 = vpop.f32.mrb[0].mxu0
        %v1447 = vadd.f32 0.0, %v1446
        %v1448 = vpop.f32.mrb[0].mxu0
        %v1449 = vpop.f32.mrb[0].mxu0
        %v1450 = vadd.f32 0.0, %v1449
        %v1451 = vpop.f32.mrb[0].mxu0
        %1452 = vdwg.mxu0
        %v1453 = vadd.f32 %v1329, %v1423
        %v1454 = vadd.f32 %v1332, %v1426
        %v1455 = vadd.f32 %v1337, %v1431
        %v1456 = vadd.f32 %v1340, %v1434
        %v1457 = vadd.f32 %v1345, %v1439
        %v1458 = vadd.f32 %v1348, %v1442
        %v1459 = vadd.f32 %v1353, %v1447
        %v1460 = vadd.f32 %v1356, %v1450
        %s1461 = scalar_lea.vmem [#allocation8], 48
        %v1462 = vld [vmem:[%s1461] sm:$0xf]
        %v1463 = vld [vmem:[%s1461 + $0x4] sm:$0xf]
        %v1464 = vld [vmem:[%s1461 + $0x8] sm:$0xf]
        %v1465 = vld [vmem:[%s1461 + $0xc] sm:$0xf]
        %v1470 = vunpack.c.l.b16 %v1462
        %v1471 = vunpack.c.l.b16 %v1463
        %v1472 = vunpack.c.l.b16 %v1464
        %v1473 = vunpack.c.l.b16 %v1465
        %v1474 = vpack.c.b16 %v1471, %v1470
        %v1475 = vpack.c.b16 %v1473, %v1472
        %v1479 = vsel %vm554, %v1158, 0
        %1481 = vmatprep.subr.bf16.mxu0 0
        %1482 = vmatpush1.bf16.msra.mxu0 %v1474
        %1483 = vmatprep.subr.bf16.mxu0 0
        %1484 = vmatpush1.bf16.msra.mxu0 %v1475
        %1485 = vmatprep.subr.bf16.mxu0 0
        %1486 = vmatpush1.bf16.msra.mxu0 0
        %1487 = vmatprep.subr.bf16.mxu0 0
        %1488 = vmatpush1.bf16.msra.mxu0 0
        %1489 = vmatprep.subr.bf16.mxu0 0
        %1490 = vmatpush1.bf16.msra.mxu0 0
        %1491 = vmatprep.subr.bf16.mxu0 0
        %1492 = vmatpush1.bf16.msra.mxu0 0
        %1493 = vmatprep.subr.bf16.mxu0 0
        %1494 = vmatpush1.bf16.msra.mxu0 0
        %1495 = vmatprep.subr.bf16.mxu0 0
        %1496 = vmatpush1.bf16.msra.mxu0 0
        %1497 = vmatprep.subr.bf16.mxu0 0
        %1498 = vmatpush1.bf16.msra.mxu0 0
        %1499 = vmatprep.subr.bf16.mxu0 0
        %1500 = vmatpush1.bf16.msra.mxu0 0
        %1501 = vmatprep.subr.bf16.mxu0 0
        %1502 = vmatpush1.bf16.msra.mxu0 0
        %1503 = vmatprep.subr.bf16.mxu0 0
        %1504 = vmatpush1.bf16.msra.mxu0 0
        %1505 = vmatprep.subr.bf16.mxu0 0
        %1506 = vmatpush1.bf16.msra.mxu0 0
        %1507 = vmatprep.subr.bf16.mxu0 0
        %1508 = vmatpush1.bf16.msra.mxu0 0
        %1509 = vmatprep.subr.bf16.mxu0 0
        %1510 = vmatpush1.bf16.msra.mxu0 0
        %1511 = vmatprep.subr.bf16.mxu0 0
        %1512 = vmatpush1.bf16.msra.mxu0 0
        %1513 = vmatprep.mubr.bf16.mxu0 0
        %1514 = vmatmul.mubr.bf16.gmra.mrb[0].mxu0 %v1286
        %v1515 = vpop.f32.mrb[0].mxu0
        %v1516 = vadd.f32 0.0, %v1515
        %v1517 = vpop.f32.mrb[0].mxu0
        %v1518 = vpop.f32.mrb[0].mxu0
        %v1519 = vadd.f32 0.0, %v1518
        %v1520 = vpop.f32.mrb[0].mxu0
        %1521 = vmatprep.mubr.bf16.mxu0 0
        %1522 = vmatmul.mubr.bf16.gmra.mrb[0].mxu0 %v1289
        %v1523 = vpop.f32.mrb[0].mxu0
        %v1524 = vadd.f32 0.0, %v1523
        %v1525 = vpop.f32.mrb[0].mxu0
        %v1526 = vpop.f32.mrb[0].mxu0
        %v1527 = vadd.f32 0.0, %v1526
        %v1528 = vpop.f32.mrb[0].mxu0
        %1529 = vmatprep.mubr.bf16.mxu0 0
        %1530 = vmatmul.mubr.bf16.gmra.mrb[0].mxu0 %v1292
        %v1531 = vpop.f32.mrb[0].mxu0
        %v1532 = vadd.f32 0.0, %v1531
        %v1533 = vpop.f32.mrb[0].mxu0
        %v1534 = vpop.f32.mrb[0].mxu0
        %v1535 = vadd.f32 0.0, %v1534
        %v1536 = vpop.f32.mrb[0].mxu0
        %1537 = vmatprep.mubr.bf16.mxu0 0
        %1538 = vmatmul.mubr.bf16.gmra.mrb[0].mxu0 %v1479
        %v1539 = vpop.f32.mrb[0].mxu0
        %v1540 = vadd.f32 0.0, %v1539
        %v1541 = vpop.f32.mrb[0].mxu0
        %v1542 = vpop.f32.mrb[0].mxu0
        %v1543 = vadd.f32 0.0, %v1542
        %v1544 = vpop.f32.mrb[0].mxu0
        %1545 = vdwg.mxu0
        %v1546 = vadd.f32 %v1453, %v1516
        %v1547 = vadd.f32 %v1454, %v1519
        %v1548 = vadd.f32 %v1455, %v1524
        %v1549 = vadd.f32 %v1456, %v1527
        %v1550 = vadd.f32 %v1457, %v1532
        %v1551 = vadd.f32 %v1458, %v1535
        %v1552 = vadd.f32 %v1459, %v1540
        %v1553 = vadd.f32 %v1460, %v1543
        %s1554 = scalar_lea.vmem [#allocation8], 64
        %v1555 = vld [vmem:[%s1554] sm:$0xf]
        %v1556 = vld [vmem:[%s1554 + $0x4] sm:$0xf]
        %v1557 = vld [vmem:[%s1554 + $0x8] sm:$0xf]
        %v1558 = vld [vmem:[%s1554 + $0xc] sm:$0xf]
        %v1563 = vunpack.c.l.b16 %v1555
        %v1564 = vunpack.c.l.b16 %v1556
        %v1565 = vunpack.c.l.b16 %v1557
        %v1566 = vunpack.c.l.b16 %v1558
        %v1567 = vpack.c.b16 %v1564, %v1563
        %v1568 = vpack.c.b16 %v1566, %v1565
        %v1572 = vsel %vm554, %v1164, 0
        %1574 = vmatprep.subr.bf16.mxu0 0
        %1575 = vmatpush1.bf16.msra.mxu0 %v1567
        %1576 = vmatprep.subr.bf16.mxu0 0
        %1577 = vmatpush1.bf16.msra.mxu0 %v1568
        %1578 = vmatprep.subr.bf16.mxu0 0
        %1579 = vmatpush1.bf16.msra.mxu0 0
        %1580 = vmatprep.subr.bf16.mxu0 0
        %1581 = vmatpush1.bf16.msra.mxu0 0
        %1582 = vmatprep.subr.bf16.mxu0 0
        %1583 = vmatpush1.bf16.msra.mxu0 0
        %1584 = vmatprep.subr.bf16.mxu0 0
        %1585 = vmatpush1.bf16.msra.mxu0 0
        %1586 = vmatprep.subr.bf16.mxu0 0
        %1587 = vmatpush1.bf16.msra.mxu0 0
        %1588 = vmatprep.subr.bf16.mxu0 0
        %1589 = vmatpush1.bf16.msra.mxu0 0
        %1590 = vmatprep.subr.bf16.mxu0 0
        %1591 = vmatpush1.bf16.msra.mxu0 0
        %1592 = vmatprep.subr.bf16.mxu0 0
        %1593 = vmatpush1.bf16.msra.mxu0 0
        %1594 = vmatprep.subr.bf16.mxu0 0
        %1595 = vmatpush1.bf16.msra.mxu0 0
        %1596 = vmatprep.subr.bf16.mxu0 0
        %1597 = vmatpush1.bf16.msra.mxu0 0
        %1598 = vmatprep.subr.bf16.mxu0 0
        %1599 = vmatpush1.bf16.msra.mxu0 0
        %1600 = vmatprep.subr.bf16.mxu0 0
        %1601 = vmatpush1.bf16.msra.mxu0 0
        %1602 = vmatprep.subr.bf16.mxu0 0
        %1603 = vmatpush1.bf16.msra.mxu0 0
        %1604 = vmatprep.subr.bf16.mxu0 0
        %1605 = vmatpush1.bf16.msra.mxu0 0
        %1606 = vmatprep.mubr.bf16.mxu0 0
        %1607 = vmatmul.mubr.bf16.gmra.mrb[0].mxu0 %v1197
        %v1608 = vpop.f32.mrb[0].mxu0
        %v1609 = vadd.f32 0.0, %v1608
        %v1610 = vpop.f32.mrb[0].mxu0
        %v1611 = vpop.f32.mrb[0].mxu0
        %v1612 = vadd.f32 0.0, %v1611
        %v1613 = vpop.f32.mrb[0].mxu0
        %1614 = vmatprep.mubr.bf16.mxu0 0
        %1615 = vmatmul.mubr.bf16.gmra.mrb[0].mxu0 %v1200
        %v1616 = vpop.f32.mrb[0].mxu0
        %v1617 = vadd.f32 0.0, %v1616
        %v1618 = vpop.f32.mrb[0].mxu0
        %v1619 = vpop.f32.mrb[0].mxu0
        %v1620 = vadd.f32 0.0, %v1619
        %v1621 = vpop.f32.mrb[0].mxu0
        %1622 = vmatprep.mubr.bf16.mxu0 0
        %1623 = vmatmul.mubr.bf16.gmra.mrb[0].mxu0 %v1203
        %v1624 = vpop.f32.mrb[0].mxu0
        %v1625 = vadd.f32 0.0, %v1624
        %v1626 = vpop.f32.mrb[0].mxu0
        %v1627 = vpop.f32.mrb[0].mxu0
        %v1628 = vadd.f32 0.0, %v1627
        %v1629 = vpop.f32.mrb[0].mxu0
        %1630 = vmatprep.mubr.bf16.mxu0 0
        %1631 = vmatmul.mubr.bf16.gmra.mrb[0].mxu0 %v1572
        %v1632 = vpop.f32.mrb[0].mxu0
        %v1633 = vadd.f32 0.0, %v1632
        %v1634 = vpop.f32.mrb[0].mxu0
        %v1635 = vpop.f32.mrb[0].mxu0
        %v1636 = vadd.f32 0.0, %v1635
        %v1637 = vpop.f32.mrb[0].mxu0
        %1638 = vdwg.mxu0
        %v1639 = vadd.f32 %v1546, %v1609
        %v1640 = vadd.f32 %v1547, %v1612
        %v1641 = vadd.f32 %v1548, %v1617
        %v1642 = vadd.f32 %v1549, %v1620
        %v1643 = vadd.f32 %v1550, %v1625
        %v1644 = vadd.f32 %v1551, %v1628
        %v1645 = vadd.f32 %v1552, %v1633
        %v1646 = vadd.f32 %v1553, %v1636
        %s1647 = scalar_lea.vmem [#allocation8], 80
        %v1648 = vld [vmem:[%s1647] sm:$0xf]
        %v1649 = vld [vmem:[%s1647 + $0x4] sm:$0xf]
        %v1650 = vld [vmem:[%s1647 + $0x8] sm:$0xf]
        %v1651 = vld [vmem:[%s1647 + $0xc] sm:$0xf]
        %v1656 = vunpack.c.l.b16 %v1648
        %v1657 = vunpack.c.l.b16 %v1649
        %v1658 = vunpack.c.l.b16 %v1650
        %v1659 = vunpack.c.l.b16 %v1651
        %v1660 = vpack.c.b16 %v1657, %v1656
        %v1661 = vpack.c.b16 %v1659, %v1658
        %v1665 = vsel %vm554, %v1170, 0
        %1667 = vmatprep.subr.bf16.mxu0 0
        %1668 = vmatpush1.bf16.msra.mxu0 %v1660
        %1669 = vmatprep.subr.bf16.mxu0 0
        %1670 = vmatpush1.bf16.msra.mxu0 %v1661
        %1671 = vmatprep.subr.bf16.mxu0 0
        %1672 = vmatpush1.bf16.msra.mxu0 0
        %1673 = vmatprep.subr.bf16.mxu0 0
        %1674 = vmatpush1.bf16.msra.mxu0 0
        %1675 = vmatprep.subr.bf16.mxu0 0
        %1676 = vmatpush1.bf16.msra.mxu0 0
        %1677 = vmatprep.subr.bf16.mxu0 0
        %1678 = vmatpush1.bf16.msra.mxu0 0
        %1679 = vmatprep.subr.bf16.mxu0 0
        %1680 = vmatpush1.bf16.msra.mxu0 0
        %1681 = vmatprep.subr.bf16.mxu0 0
        %1682 = vmatpush1.bf16.msra.mxu0 0
        %1683 = vmatprep.subr.bf16.mxu0 0
        %1684 = vmatpush1.bf16.msra.mxu0 0
        %1685 = vmatprep.subr.bf16.mxu0 0
        %1686 = vmatpush1.bf16.msra.mxu0 0
        %1687 = vmatprep.subr.bf16.mxu0 0
        %1688 = vmatpush1.bf16.msra.mxu0 0
        %1689 = vmatprep.subr.bf16.mxu0 0
        %1690 = vmatpush1.bf16.msra.mxu0 0
        %1691 = vmatprep.subr.bf16.mxu0 0
        %1692 = vmatpush1.bf16.msra.mxu0 0
        %1693 = vmatprep.subr.bf16.mxu0 0
        %1694 = vmatpush1.bf16.msra.mxu0 0
        %1695 = vmatprep.subr.bf16.mxu0 0
        %1696 = vmatpush1.bf16.msra.mxu0 0
        %1697 = vmatprep.subr.bf16.mxu0 0
        %1698 = vmatpush1.bf16.msra.mxu0 0
        %1699 = vmatprep.mubr.bf16.mxu0 0
        %1700 = vmatmul.mubr.bf16.gmra.mrb[0].mxu0 %v1380
        %v1701 = vpop.f32.mrb[0].mxu0
        %v1702 = vadd.f32 0.0, %v1701
        %v1703 = vpop.f32.mrb[0].mxu0
        %v1704 = vpop.f32.mrb[0].mxu0
        %v1705 = vadd.f32 0.0, %v1704
        %v1706 = vpop.f32.mrb[0].mxu0
        %1707 = vmatprep.mubr.bf16.mxu0 0
        %1708 = vmatmul.mubr.bf16.gmra.mrb[0].mxu0 %v1383
        %v1709 = vpop.f32.mrb[0].mxu0
        %v1710 = vadd.f32 0.0, %v1709
        %v1711 = vpop.f32.mrb[0].mxu0
        %v1712 = vpop.f32.mrb[0].mxu0
        %v1713 = vadd.f32 0.0, %v1712
        %v1714 = vpop.f32.mrb[0].mxu0
        %1715 = vmatprep.mubr.bf16.mxu0 0
        %1716 = vmatmul.mubr.bf16.gmra.mrb[0].mxu0 %v1386
        %v1717 = vpop.f32.mrb[0].mxu0
        %v1718 = vadd.f32 0.0, %v1717
        %v1719 = vpop.f32.mrb[0].mxu0
        %v1720 = vpop.f32.mrb[0].mxu0
        %v1721 = vadd.f32 0.0, %v1720
        %v1722 = vpop.f32.mrb[0].mxu0
        %1723 = vmatprep.mubr.bf16.mxu0 0
        %1724 = vmatmul.mubr.bf16.gmra.mrb[0].mxu0 %v1665
        %v1725 = vpop.f32.mrb[0].mxu0
        %v1726 = vadd.f32 0.0, %v1725
        %v1727 = vpop.f32.mrb[0].mxu0
        %v1728 = vpop.f32.mrb[0].mxu0
        %v1729 = vadd.f32 0.0, %v1728
        %v1730 = vpop.f32.mrb[0].mxu0
        %1731 = vdwg.mxu0
        %v1732 = vadd.f32 %v1639, %v1702
        %v1733 = vadd.f32 %v1640, %v1705
        %v1734 = vadd.f32 %v1641, %v1710
        %v1735 = vadd.f32 %v1642, %v1713
        %v1736 = vadd.f32 %v1643, %v1718
        %v1737 = vadd.f32 %v1644, %v1721
        %v1738 = vadd.f32 %v1645, %v1726
        %v1739 = vadd.f32 %v1646, %v1729
        %s1740 = scalar_lea.vmem [#allocation8], 96
        %v1741 = vld [vmem:[%s1740] sm:$0xf]
        %v1742 = vld [vmem:[%s1740 + $0x4] sm:$0xf]
        %v1743 = vld [vmem:[%s1740 + $0x8] sm:$0xf]
        %v1744 = vld [vmem:[%s1740 + $0xc] sm:$0xf]
        %v1749 = vunpack.c.l.b16 %v1741
        %v1750 = vunpack.c.l.b16 %v1742
        %v1751 = vunpack.c.l.b16 %v1743
        %v1752 = vunpack.c.l.b16 %v1744
        %v1753 = vpack.c.b16 %v1750, %v1749
        %v1754 = vpack.c.b16 %v1752, %v1751
        %v1758 = vsel %vm554, %v1159, 0
        %1760 = vmatprep.subr.bf16.mxu0 0
        %1761 = vmatpush1.bf16.msra.mxu0 %v1753
        %1762 = vmatprep.subr.bf16.mxu0 0
        %1763 = vmatpush1.bf16.msra.mxu0 %v1754
        %1764 = vmatprep.subr.bf16.mxu0 0
        %1765 = vmatpush1.bf16.msra.mxu0 0
        %1766 = vmatprep.subr.bf16.mxu0 0
        %1767 = vmatpush1.bf16.msra.mxu0 0
        %1768 = vmatprep.subr.bf16.mxu0 0
        %1769 = vmatpush1.bf16.msra.mxu0 0
        %1770 = vmatprep.subr.bf16.mxu0 0
        %1771 = vmatpush1.bf16.msra.mxu0 0
        %1772 = vmatprep.subr.bf16.mxu0 0
        %1773 = vmatpush1.bf16.msra.mxu0 0
        %1774 = vmatprep.subr.bf16.mxu0 0
        %1775 = vmatpush1.bf16.msra.mxu0 0
        %1776 = vmatprep.subr.bf16.mxu0 0
        %1777 = vmatpush1.bf16.msra.mxu0 0
        %1778 = vmatprep.subr.bf16.mxu0 0
        %1779 = vmatpush1.bf16.msra.mxu0 0
        %1780 = vmatprep.subr.bf16.mxu0 0
        %1781 = vmatpush1.bf16.msra.mxu0 0
        %1782 = vmatprep.subr.bf16.mxu0 0
        %1783 = vmatpush1.bf16.msra.mxu0 0
        %1784 = vmatprep.subr.bf16.mxu0 0
        %1785 = vmatpush1.bf16.msra.mxu0 0
        %1786 = vmatprep.subr.bf16.mxu0 0
        %1787 = vmatpush1.bf16.msra.mxu0 0
        %1788 = vmatprep.subr.bf16.mxu0 0
        %1789 = vmatpush1.bf16.msra.mxu0 0
        %1790 = vmatprep.subr.bf16.mxu0 0
        %1791 = vmatpush1.bf16.msra.mxu0 0
        %1792 = vmatprep.mubr.bf16.mxu0 0
        %1793 = vmatmul.mubr.bf16.gmra.mrb[0].mxu0 %v1289
        %v1794 = vpop.f32.mrb[0].mxu0
        %v1795 = vadd.f32 0.0, %v1794
        %v1796 = vpop.f32.mrb[0].mxu0
        %v1797 = vpop.f32.mrb[0].mxu0
        %v1798 = vadd.f32 0.0, %v1797
        %v1799 = vpop.f32.mrb[0].mxu0
        %1800 = vmatprep.mubr.bf16.mxu0 0
        %1801 = vmatmul.mubr.bf16.gmra.mrb[0].mxu0 %v1292
        %v1802 = vpop.f32.mrb[0].mxu0
        %v1803 = vadd.f32 0.0, %v1802
        %v1804 = vpop.f32.mrb[0].mxu0
        %v1805 = vpop.f32.mrb[0].mxu0
        %v1806 = vadd.f32 0.0, %v1805
        %v1807 = vpop.f32.mrb[0].mxu0
        %1808 = vmatprep.mubr.bf16.mxu0 0
        %1809 = vmatmul.mubr.bf16.gmra.mrb[0].mxu0 %v1479
        %v1810 = vpop.f32.mrb[0].mxu0
        %v1811 = vadd.f32 0.0, %v1810
        %v1812 = vpop.f32.mrb[0].mxu0
        %v1813 = vpop.f32.mrb[0].mxu0
        %v1814 = vadd.f32 0.0, %v1813
        %v1815 = vpop.f32.mrb[0].mxu0
        %1816 = vmatprep.mubr.bf16.mxu0 0
        %1817 = vmatmul.mubr.bf16.gmra.mrb[0].mxu0 %v1758
        %v1818 = vpop.f32.mrb[0].mxu0
        %v1819 = vadd.f32 0.0, %v1818
        %v1820 = vpop.f32.mrb[0].mxu0
        %v1821 = vpop.f32.mrb[0].mxu0
        %v1822 = vadd.f32 0.0, %v1821
        %v1823 = vpop.f32.mrb[0].mxu0
        %1824 = vdwg.mxu0
        %v1825 = vadd.f32 %v1732, %v1795
        %v1826 = vadd.f32 %v1733, %v1798
        %v1827 = vadd.f32 %v1734, %v1803
        %v1828 = vadd.f32 %v1735, %v1806
        %v1829 = vadd.f32 %v1736, %v1811
        %v1830 = vadd.f32 %v1737, %v1814
        %v1831 = vadd.f32 %v1738, %v1819
        %v1832 = vadd.f32 %v1739, %v1822
        %s1833 = scalar_lea.vmem [#allocation8], 112
        %v1834 = vld [vmem:[%s1833] sm:$0xf]
        %v1835 = vld [vmem:[%s1833 + $0x4] sm:$0xf]
        %v1836 = vld [vmem:[%s1833 + $0x8] sm:$0xf]
        %v1837 = vld [vmem:[%s1833 + $0xc] sm:$0xf]
        %v1842 = vunpack.c.l.b16 %v1834
        %v1843 = vunpack.c.l.b16 %v1835
        %v1844 = vunpack.c.l.b16 %v1836
        %v1845 = vunpack.c.l.b16 %v1837
        %v1846 = vpack.c.b16 %v1843, %v1842
        %v1847 = vpack.c.b16 %v1845, %v1844
        %v1851 = vsel %vm554, %v1165, 0
        %1853 = vmatprep.subr.bf16.mxu0 0
        %1854 = vmatpush1.bf16.msra.mxu0 %v1846
        %1855 = vmatprep.subr.bf16.mxu0 0
        %1856 = vmatpush1.bf16.msra.mxu0 %v1847
        %1857 = vmatprep.subr.bf16.mxu0 0
        %1858 = vmatpush1.bf16.msra.mxu0 0
        %1859 = vmatprep.subr.bf16.mxu0 0
        %1860 = vmatpush1.bf16.msra.mxu0 0
        %1861 = vmatprep.subr.bf16.mxu0 0
        %1862 = vmatpush1.bf16.msra.mxu0 0
        %1863 = vmatprep.subr.bf16.mxu0 0
        %1864 = vmatpush1.bf16.msra.mxu0 0
        %1865 = vmatprep.subr.bf16.mxu0 0
        %1866 = vmatpush1.bf16.msra.mxu0 0
        %1867 = vmatprep.subr.bf16.mxu0 0
        %1868 = vmatpush1.bf16.msra.mxu0 0
        %1869 = vmatprep.subr.bf16.mxu0 0
        %1870 = vmatpush1.bf16.msra.mxu0 0
        %1871 = vmatprep.subr.bf16.mxu0 0
        %1872 = vmatpush1.bf16.msra.mxu0 0
        %1873 = vmatprep.subr.bf16.mxu0 0
        %1874 = vmatpush1.bf16.msra.mxu0 0
        %1875 = vmatprep.subr.bf16.mxu0 0
        %1876 = vmatpush1.bf16.msra.mxu0 0
        %1877 = vmatprep.subr.bf16.mxu0 0
        %1878 = vmatpush1.bf16.msra.mxu0 0
        %1879 = vmatprep.subr.bf16.mxu0 0
        %1880 = vmatpush1.bf16.msra.mxu0 0
        %1881 = vmatprep.subr.bf16.mxu0 0
        %1882 = vmatpush1.bf16.msra.mxu0 0
        %1883 = vmatprep.subr.bf16.mxu0 0
        %1884 = vmatpush1.bf16.msra.mxu0 0
        %1885 = vmatprep.mubr.bf16.mxu0 0
        %1886 = vmatmul.mubr.bf16.gmra.mrb[0].mxu0 %v1200
        %v1887 = vpop.f32.mrb[0].mxu0
        %v1888 = vadd.f32 0.0, %v1887
        %v1889 = vpop.f32.mrb[0].mxu0
        %v1890 = vpop.f32.mrb[0].mxu0
        %v1891 = vadd.f32 0.0, %v1890
        %v1892 = vpop.f32.mrb[0].mxu0
        %1893 = vmatprep.mubr.bf16.mxu0 0
        %1894 = vmatmul.mubr.bf16.gmra.mrb[0].mxu0 %v1203
        %v1895 = vpop.f32.mrb[0].mxu0
        %v1896 = vadd.f32 0.0, %v1895
        %v1897 = vpop.f32.mrb[0].mxu0
        %v1898 = vpop.f32.mrb[0].mxu0
        %v1899 = vadd.f32 0.0, %v1898
        %v1900 = vpop.f32.mrb[0].mxu0
        %1901 = vmatprep.mubr.bf16.mxu0 0
        %1902 = vmatmul.mubr.bf16.gmra.mrb[0].mxu0 %v1572
        %v1903 = vpop.f32.mrb[0].mxu0
        %v1904 = vadd.f32 0.0, %v1903
        %v1905 = vpop.f32.mrb[0].mxu0
        %v1906 = vpop.f32.mrb[0].mxu0
        %v1907 = vadd.f32 0.0, %v1906
        %v1908 = vpop.f32.mrb[0].mxu0
        %1909 = vmatprep.mubr.bf16.mxu0 0
        %1910 = vmatmul.mubr.bf16.gmra.mrb[0].mxu0 %v1851
        %v1911 = vpop.f32.mrb[0].mxu0
        %v1912 = vadd.f32 0.0, %v1911
        %v1913 = vpop.f32.mrb[0].mxu0
        %v1914 = vpop.f32.mrb[0].mxu0
        %v1915 = vadd.f32 0.0, %v1914
        %v1916 = vpop.f32.mrb[0].mxu0
        %1917 = vdwg.mxu0
        %v1918 = vadd.f32 %v1825, %v1888
        %v1919 = vadd.f32 %v1826, %v1891
        %v1920 = vadd.f32 %v1827, %v1896
        %v1921 = vadd.f32 %v1828, %v1899
        %v1922 = vadd.f32 %v1829, %v1904
        %v1923 = vadd.f32 %v1830, %v1907
        %v1924 = vadd.f32 %v1831, %v1912
        %v1925 = vadd.f32 %v1832, %v1915
        %s1926 = scalar_lea.vmem [#allocation8], 128
        %v1927 = vld [vmem:[%s1926] sm:$0xf]
        %v1928 = vld [vmem:[%s1926 + $0x4] sm:$0xf]
        %v1929 = vld [vmem:[%s1926 + $0x8] sm:$0xf]
        %v1930 = vld [vmem:[%s1926 + $0xc] sm:$0xf]
        %v1935 = vunpack.c.l.b16 %v1927
        %v1936 = vunpack.c.l.b16 %v1928
        %v1937 = vunpack.c.l.b16 %v1929
        %v1938 = vunpack.c.l.b16 %v1930
        %v1939 = vpack.c.b16 %v1936, %v1935
        %v1940 = vpack.c.b16 %v1938, %v1937
        %v1944 = vsel %vm554, %v1171, 0
        %1946 = vmatprep.subr.bf16.mxu0 0
        %1947 = vmatpush1.bf16.msra.mxu0 %v1939
        %1948 = vmatprep.subr.bf16.mxu0 0
        %1949 = vmatpush1.bf16.msra.mxu0 %v1940
        %1950 = vmatprep.subr.bf16.mxu0 0
        %1951 = vmatpush1.bf16.msra.mxu0 0
        %1952 = vmatprep.subr.bf16.mxu0 0
        %1953 = vmatpush1.bf16.msra.mxu0 0
        %1954 = vmatprep.subr.bf16.mxu0 0
        %1955 = vmatpush1.bf16.msra.mxu0 0
        %1956 = vmatprep.subr.bf16.mxu0 0
        %1957 = vmatpush1.bf16.msra.mxu0 0
        %1958 = vmatprep.subr.bf16.mxu0 0
        %1959 = vmatpush1.bf16.msra.mxu0 0
        %1960 = vmatprep.subr.bf16.mxu0 0
        %1961 = vmatpush1.bf16.msra.mxu0 0
        %1962 = vmatprep.subr.bf16.mxu0 0
        %1963 = vmatpush1.bf16.msra.mxu0 0
        %1964 = vmatprep.subr.bf16.mxu0 0
        %1965 = vmatpush1.bf16.msra.mxu0 0
        %1966 = vmatprep.subr.bf16.mxu0 0
        %1967 = vmatpush1.bf16.msra.mxu0 0
        %1968 = vmatprep.subr.bf16.mxu0 0
        %1969 = vmatpush1.bf16.msra.mxu0 0
        %1970 = vmatprep.subr.bf16.mxu0 0
        %1971 = vmatpush1.bf16.msra.mxu0 0
        %1972 = vmatprep.subr.bf16.mxu0 0
        %1973 = vmatpush1.bf16.msra.mxu0 0
        %1974 = vmatprep.subr.bf16.mxu0 0
        %1975 = vmatpush1.bf16.msra.mxu0 0
        %1976 = vmatprep.subr.bf16.mxu0 0
        %1977 = vmatpush1.bf16.msra.mxu0 0
        %1978 = vmatprep.mubr.bf16.mxu0 0
        %1979 = vmatmul.mubr.bf16.gmra.mrb[0].mxu0 %v1383
        %v1980 = vpop.f32.mrb[0].mxu0
        %v1981 = vadd.f32 0.0, %v1980
        %v1982 = vpop.f32.mrb[0].mxu0
        %v1983 = vpop.f32.mrb[0].mxu0
        %v1984 = vadd.f32 0.0, %v1983
        %v1985 = vpop.f32.mrb[0].mxu0
        %1986 = vmatprep.mubr.bf16.mxu0 0
        %1987 = vmatmul.mubr.bf16.gmra.mrb[0].mxu0 %v1386
        %v1988 = vpop.f32.mrb[0].mxu0
        %v1989 = vadd.f32 0.0, %v1988
        %v1990 = vpop.f32.mrb[0].mxu0
        %v1991 = vpop.f32.mrb[0].mxu0
        %v1992 = vadd.f32 0.0, %v1991
        %v1993 = vpop.f32.mrb[0].mxu0
        %1994 = vmatprep.mubr.bf16.mxu0 0
        %1995 = vmatmul.mubr.bf16.gmra.mrb[0].mxu0 %v1665
        %v1996 = vpop.f32.mrb[0].mxu0
        %v1997 = vadd.f32 0.0, %v1996
        %v1998 = vpop.f32.mrb[0].mxu0
        %v1999 = vpop.f32.mrb[0].mxu0
        %v2000 = vadd.f32 0.0, %v1999
        %v2001 = vpop.f32.mrb[0].mxu0
        %2002 = vmatprep.mubr.bf16.mxu0 0
        %2003 = vmatmul.mubr.bf16.gmra.mrb[0].mxu0 %v1944
        %v2004 = vpop.f32.mrb[0].mxu0
        %v2005 = vadd.f32 0.0, %v2004
        %v2006 = vpop.f32.mrb[0].mxu0
        %v2007 = vpop.f32.mrb[0].mxu0
        %v2008 = vadd.f32 0.0, %v2007
        %v2009 = vpop.f32.mrb[0].mxu0
        %2010 = vdwg.mxu0
        %v2011 = vadd.f32 %v1918, %v1981
        %v2012 = vadd.f32 %v1919, %v1984
        %v2013 = vadd.f32 %v1920, %v1989
        %v2014 = vadd.f32 %v1921, %v1992
        %v2015 = vadd.f32 %v1922, %v1997
        %v2016 = vadd.f32 %v1923, %v2000
        %v2017 = vadd.f32 %v1924, %v2005
        %v2018 = vadd.f32 %v1925, %v2008
        %v2019 = vld [vmem:[%s5] sm:$0x1]
        %v2021 = vlaneseq
        %v2022 = vshrl.u32 %v2021, 7
        %v2023 = vsub.s32 0, %v2022
        %v2024 = vrot.slane %v2019, %v2023
        %v2026 = vadd.f32 %v2011, %v2024
        %v2027 = vadd.f32 %v2012, %v2024
        %v2028 = vadd.f32 %v2013, %v2024
        %v2029 = vadd.f32 %v2014, %v2024
        %v2030 = vadd.f32 %v2015, %v2024
        %v2031 = vadd.f32 %v2016, %v2024
        %v2032 = vadd.f32 %v2017, %v2024
        %v2033 = vadd.f32 %v2018, %v2024
        %vm2034 = vcmp.ge.f32.partialorder %v2026, 0.0
        %vm2035 = vcmp.ge.f32.partialorder %v2027, 0.0
        %vm2036 = vcmp.ge.f32.partialorder %v2028, 0.0
        %vm2037 = vcmp.ge.f32.partialorder %v2029, 0.0
        %vm2038 = vcmp.ge.f32.partialorder %v2030, 0.0
        %vm2039 = vcmp.ge.f32.partialorder %v2031, 0.0
        %vm2040 = vcmp.ge.f32.partialorder %v2032, 0.0
        %vm2041 = vcmp.ge.f32.partialorder %v2033, 0.0
        %v2042 = vmul.f32 %v2026, 0.1
        %v2043 = vmul.f32 %v2027, 0.1
        %v2044 = vmul.f32 %v2028, 0.1
        %v2045 = vmul.f32 %v2029, 0.1
        %v2046 = vmul.f32 %v2030, 0.1
        %v2047 = vmul.f32 %v2031, 0.1
        %v2048 = vmul.f32 %v2032, 0.1
        %v2049 = vmul.f32 %v2033, 0.1
        %v2050 = vsel %vm2034, %v2026, %v2042
        %v2051 = vsel %vm2035, %v2027, %v2043
        %v2052 = vsel %vm2036, %v2028, %v2044
        %v2053 = vsel %vm2037, %v2029, %v2045
        %v2054 = vsel %vm2038, %v2030, %v2046
        %v2055 = vsel %vm2039, %v2031, %v2047
        %v2056 = vsel %vm2040, %v2032, %v2048
        %v2057 = vsel %vm2041, %v2033, %v2049
        %v2058 = vpack.c.bf16 %v2051, %v2050
        %v2059 = vpack.c.bf16 %v2053, %v2052
        %v2060 = vpack.c.bf16 %v2055, %v2054
        %v2061 = vpack.c.bf16 %v2057, %v2056
        %v2062 = vld [vmem:[%s6] sm:$0xf]
        %v2063 = vld [vmem:[%s6 + $0x4] sm:$0xf]
        %v2064 = vld [vmem:[%s6 + $0x8] sm:$0xf]
        %v2065 = vld [vmem:[%s6 + $0xc] sm:$0xf]
        %v2066 = vld [vmem:[%s7] sm:$0x1]
        %v2068 = vlaneseq
        %v2069 = vshrl.u32 %v2068, 7
        %v2070 = vsub.s32 0, %v2069
        %v2071 = vrot.slane %v2066, %v2070
        %v2077 = vunpack.c.l.b16 %v2062
        %v2078 = vunpack.c.l.b16 %v2063
        %v2079 = vunpack.c.l.b16 %v2064
        %v2080 = vunpack.c.l.b16 %v2065
        %v2081 = vpack.c.b16 %v2078, %v2077
        %v2082 = vpack.c.b16 %v2080, %v2079
        %v2086 = vsel %vm554, %v2058, 0
        %v2089 = vsel %vm554, %v2059, 0
        %v2092 = vsel %vm554, %v2060, 0
        %v2095 = vsel %vm554, %v2061, 0
        %2097 = vmatprep.subr.bf16.mxu0 0
        %2098 = vmatpush1.bf16.msra.mxu0 %v2081
        %2099 = vmatprep.subr.bf16.mxu0 0
        %2100 = vmatpush1.bf16.msra.mxu0 %v2082
        %2101 = vmatprep.subr.bf16.mxu0 0
        %2102 = vmatpush1.bf16.msra.mxu0 0
        %2103 = vmatprep.subr.bf16.mxu0 0
        %2104 = vmatpush1.bf16.msra.mxu0 0
        %2105 = vmatprep.subr.bf16.mxu0 0
        %2106 = vmatpush1.bf16.msra.mxu0 0
        %2107 = vmatprep.subr.bf16.mxu0 0
        %2108 = vmatpush1.bf16.msra.mxu0 0
        %2109 = vmatprep.subr.bf16.mxu0 0
        %2110 = vmatpush1.bf16.msra.mxu0 0
        %2111 = vmatprep.subr.bf16.mxu0 0
        %2112 = vmatpush1.bf16.msra.mxu0 0
        %2113 = vmatprep.subr.bf16.mxu0 0
        %2114 = vmatpush1.bf16.msra.mxu0 0
        %2115 = vmatprep.subr.bf16.mxu0 0
        %2116 = vmatpush1.bf16.msra.mxu0 0
        %2117 = vmatprep.subr.bf16.mxu0 0
        %2118 = vmatpush1.bf16.msra.mxu0 0
        %2119 = vmatprep.subr.bf16.mxu0 0
        %2120 = vmatpush1.bf16.msra.mxu0 0
        %2121 = vmatprep.subr.bf16.mxu0 0
        %2122 = vmatpush1.bf16.msra.mxu0 0
        %2123 = vmatprep.subr.bf16.mxu0 0
        %2124 = vmatpush1.bf16.msra.mxu0 0
        %2125 = vmatprep.subr.bf16.mxu0 0
        %2126 = vmatpush1.bf16.msra.mxu0 0
        %2127 = vmatprep.subr.bf16.mxu0 0
        %2128 = vmatpush1.bf16.msra.mxu0 0
        %2129 = vmatprep.mubr.bf16.mxu0 0
        %2130 = vmatmul.mubr.bf16.gmra.mrb[0].mxu0 %v2086
        %v2131 = vpop.f32.mrb[0].mxu0
        %v2132 = vadd.f32 %v2071, %v2131
        %v2133 = vpop.f32.mrb[0].mxu0
        %v2134 = vpop.f32.mrb[0].mxu0
        %v2135 = vadd.f32 %v2071, %v2134
        %v2136 = vpop.f32.mrb[0].mxu0
        %2137 = vmatprep.mubr.bf16.mxu0 0
        %2138 = vmatmul.mubr.bf16.gmra.mrb[0].mxu0 %v2089
        %v2139 = vpop.f32.mrb[0].mxu0
        %v2140 = vadd.f32 %v2071, %v2139
        %v2141 = vpop.f32.mrb[0].mxu0
        %v2142 = vpop.f32.mrb[0].mxu0
        %v2143 = vadd.f32 %v2071, %v2142
        %v2144 = vpop.f32.mrb[0].mxu0
        %2145 = vmatprep.mubr.bf16.mxu0 0
        %2146 = vmatmul.mubr.bf16.gmra.mrb[0].mxu0 %v2092
        %v2147 = vpop.f32.mrb[0].mxu0
        %v2148 = vadd.f32 %v2071, %v2147
        %v2149 = vpop.f32.mrb[0].mxu0
        %v2150 = vpop.f32.mrb[0].mxu0
        %v2151 = vadd.f32 %v2071, %v2150
        %v2152 = vpop.f32.mrb[0].mxu0
        %2153 = vmatprep.mubr.bf16.mxu0 0
        %2154 = vmatmul.mubr.bf16.gmra.mrb[0].mxu0 %v2095
        %v2155 = vpop.f32.mrb[0].mxu0
        %v2156 = vadd.f32 %v2071, %v2155
        %v2157 = vpop.f32.mrb[0].mxu0
        %v2158 = vpop.f32.mrb[0].mxu0
        %v2159 = vadd.f32 %v2071, %v2158
        %v2160 = vpop.f32.mrb[0].mxu0
        %2161 = vdwg.mxu0
        %v2162 = vadd.f32 %v2132, %v381
        %v2163 = vadd.f32 %v2135, %v382
        %v2164 = vadd.f32 %v2140, %v383
        %v2165 = vadd.f32 %v2143, %v384
        %v2166 = vadd.f32 %v2148, %v385
        %v2167 = vadd.f32 %v2151, %v386
        %v2168 = vadd.f32 %v2156, %v387
        %v2169 = vadd.f32 %v2159, %v388
        %vm2170 = vcmp.ge.f32.partialorder %v2162, 0.0
        %vm2171 = vcmp.ge.f32.partialorder %v2163, 0.0
        %vm2172 = vcmp.ge.f32.partialorder %v2164, 0.0
        %vm2173 = vcmp.ge.f32.partialorder %v2165, 0.0
        %vm2174 = vcmp.ge.f32.partialorder %v2166, 0.0
        %vm2175 = vcmp.ge.f32.partialorder %v2167, 0.0
        %vm2176 = vcmp.ge.f32.partialorder %v2168, 0.0
        %vm2177 = vcmp.ge.f32.partialorder %v2169, 0.0
        %v2178 = vmul.f32 %v2162, 0.1
        %v2179 = vmul.f32 %v2163, 0.1
        %v2180 = vmul.f32 %v2164, 0.1
        %v2181 = vmul.f32 %v2165, 0.1
        %v2182 = vmul.f32 %v2166, 0.1
        %v2183 = vmul.f32 %v2167, 0.1
        %v2184 = vmul.f32 %v2168, 0.1
        %v2185 = vmul.f32 %v2169, 0.1
        %v2186 = vsel %vm2170, %v2162, %v2178
        %v2187 = vsel %vm2171, %v2163, %v2179
        %v2188 = vsel %vm2172, %v2164, %v2180
        %v2189 = vsel %vm2173, %v2165, %v2181
        %v2190 = vsel %vm2174, %v2166, %v2182
        %v2191 = vsel %vm2175, %v2167, %v2183
        %v2192 = vsel %vm2176, %v2168, %v2184
        %v2193 = vsel %vm2177, %v2169, %v2185
        %2194 = vst [vmem:[%s331] sm:$0xff] %v2186
        %2195 = vst [vmem:[%s331 + $0x8] sm:$0xff] %v2187
        %2196 = vst [vmem:[%s331 + $0x10] sm:$0xff] %v2188
        %2197 = vst [vmem:[%s331 + $0x18] sm:$0xff] %v2189
        %2198 = vst [vmem:[%s331 + $0x20] sm:$0xff] %v2190
        %2199 = vst [vmem:[%s331 + $0x28] sm:$0xff] %v2191
        %2200 = vst [vmem:[%s331 + $0x30] sm:$0xff] %v2192
        %2201 = vst [vmem:[%s331 + $0x38] sm:$0xff] %v2193
        %s2202 = sand.u32 %s202, 1
        %s2203 = scalar_lea.sflag [#allocation7], %s2202
        %s2204 = sand.u32 %s202, 1
        %s2205 = smul.addr %s2204, 64
        %s2206 = scalar_lea.vmem [#allocation10], %s2205
        // Predicated region
        $region89: #{tpu_custom_call.1} parent=47 // pred_check
          %p2207 = pneg %p212
        $region90: #{tpu_custom_call.1} parent=47 // pred_check_branch
          %2209 = sbr.rel (%p2207) target = $region92
        $region91: #{tpu_custom_call.1} parent=47 // pred_region
          %s2210 = smul.u32 4, %s31
          %s2212 = ssub.s32 1024, 1024
          %2213 = vsyncadd %s2203, %s2212
          %s2214 = smul.addr %s2210, 2
          %s2215 = smul.addr %s30, 32
          %s2216 = sadd.s32 %s2214, %s2215
          %s2217 = smul.addr %s2216, 128
          %s2218 = scalar_lea.hbm %s8, %s2217
          %s2219 = sshll.u32 %s2206, 4
          %s2220 = int_to_ptr.vmem [resolvable:$true] %s2219
          %2225 = dma.vmem_to_hbm [thread:$0]  %s2220, 1024, %s2218, %s2203, 128, 128, 8
        $region92: #{tpu_custom_call.1} parent=47 // pred_fallthru
          _
      $region48: #{tpu_custom_call.1} parent=5 // pred_fallthru
        _
      %p2226 = scmp.le.s32.totalorder 2, %s21
      // Predicated region
      $region93: #{tpu_custom_call.1} parent=5 // pred_check
        %p2227 = pneg %p2226
      $region94: #{tpu_custom_call.1} parent=5 // pred_check_branch
        %2229 = sbr.rel (%p2227) target = $region96
      $region95: #{tpu_custom_call.1} parent=5 // pred_region
        %s2230 = ssub.s32 %s21, 2
        // Predicated region
        $region97: #{tpu_custom_call.1} parent=95 // pred_check
          %p2231 = pneg %p218
        $region98: #{tpu_custom_call.1} parent=95 // pred_check_branch
          %2233 = sbr.rel (%p2231) target = $region100
        $region99: #{tpu_custom_call.1} parent=95 // pred_region
          %s2234 = sand.u32 %s203, 1
          %s2235 = scalar_lea.sflag [#allocation7], %s2234
          %s2236 = sand.u32 %s203, 1
          %s2237 = smul.addr %s2236, 64
          %s2238 = scalar_lea.vmem [#allocation10], %s2237
          %2239 = dma.done %s2235, 1024
        $region100: #{tpu_custom_call.1} parent=95 // pred_fallthru
          _
      $region96: #{tpu_custom_call.1} parent=5 // pred_fallthru
        _
    $region6: #{tpu_custom_call.1} parent=1 // loop_footer
      %s25 = sadd.s32 1, %s21
    $region7: #{tpu_custom_call.1} parent=1 // loop_footer_branch
      %20 = sbr.rel target = $region3
    $region8: #{tpu_custom_call.1} parent=1 // loop_exit
      _
    %2240 = vsyncpa [#allocation6], 1
    %s2241 = scalar_lea.sflag [#allocation6], 1
    %2242 = vsyncpa %s2241, 1
    %2243 = vsyncpa [#allocation9], 1
    %2244 = vsyncpa [#allocation7], 1
    %s2245 = scalar_lea.sflag [#allocation7], 1
    %2246 = vsyncpa %s2245, 1
  %2247 = vsyncmov [#allocation4]
  %s2248 = vpop.sfrf %2247
  %p2249 = scmp.eq.s32.totalorder %s2248, 0
  %p2250 = pneg %p2249
  %2252 = shalt.err (%p2250)
  %s2253 = scalar_lea.sflag [#allocation4], 1
  %2254 = vsyncmov %s2253
  %s2255 = vpop.sfrf %2254
  %p2256 = scmp.eq.s32.totalorder %s2255, 0
  %p2257 = pneg %p2256
  %2259 = shalt.err (%p2257)

</llo_original>
